<compile_context>
chip_gen: v5e
topology: v5e:2x2
jax: 0.10.0
libtpu: 0.0.40
codegen_flags: <defaults>
</compile_context>

<pallas_src>
import jax
import jax.numpy as jnp
from jax.experimental import pallas as pl
from jax.experimental.pallas import tpu as pltpu

# ----------------------------- model config ---------------------------------
B = 2          # batch
S = 8          # sequence length
D = 32         # d_model
H = 4          # nhead
DH = D // H    # head dim
FF = 64        # dim_feedforward
NUM_LAYERS = 2
LN_EPS = 1e-5


def _layernorm(x, g, b, eps=LN_EPS):
    mu = jnp.mean(x, axis=-1, keepdims=True)
    var = jnp.mean((x - mu) ** 2, axis=-1, keepdims=True)
    return (x - mu) * jax.lax.rsqrt(var + eps) * g + b


# ------------------------------ Pallas kernel --------------------------------
def encoder_kernel(src_ref, pos_ref, wqkv_ref, wo_ref, w1_ref, w2_ref,
                   vecs_ref, out_ref):
    T, Dm = src_ref.shape                    # T = S tokens of one batch element
    L = wqkv_ref.shape[0]
    scale = 1.0 / (DH ** 0.5)
    bf16 = jnp.bfloat16

    x = src_ref[...]                         # (T, D)  f32 activations
    pos = pos_ref[...]                       # (T, D)  f32

    # Static unroll over layers (L=2). TODO(synk): for deeper stacks switch to
    # lax.fori_loop with dynamic ref[l] indexing to bound vreg live ranges.
    for l in range(L):
        slab = wqkv_ref[l]                   # (D, 3D) bf16  = [Wq | Wk | Wv]
        wo = wo_ref[l]                       # (D, D)  bf16
        w1 = w1_ref[l]                       # (D, FF) bf16
        w2 = w2_ref[l]                       # (FF, D) bf16
        vec = vecs_ref[l]                    # (8, 3D) f32 packed biases / LN params
        bqk = vec[0:1, :2 * Dm]              # (1, 2D) = [bq | bk]
        bv = vec[0:1, 2 * Dm:3 * Dm]         # (1, D)
        bo = vec[1:2, :Dm]
        b1 = vec[2:3, :FF]
        b2 = vec[3:4, :Dm]
        g1, be1 = vec[4:5, :Dm], vec[5:6, :Dm]
        g2, be2 = vec[6:7, :Dm], vec[7:8, :Dm]

        # ---- fused QKV projection: two full-width 2-D matmuls ----
        xp = (x + pos).astype(bf16)                              # with_pos_embed
        qk = jnp.dot(xp, slab[:, :2 * Dm],
                     preferred_element_type=jnp.float32) + bqk   # (T, 2D)
        v = jnp.dot(x.astype(bf16), slab[:, 2 * Dm:],
                    preferred_element_type=jnp.float32) + bv     # (T, D)

        # carve heads from the lane axis; fold 1/sqrt(DH) into q
        qh = (qk[:, :Dm] * scale).astype(bf16).reshape(T, H, DH)
        kh = qk[:, Dm:].astype(bf16).reshape(T, H, DH)
        vh = v.astype(bf16).reshape(T, H, DH)

        # ---- attention scores + softmax (f32 statistics) ----
        s = jnp.einsum('qhd,khd->hqk', qh, kh,
                       preferred_element_type=jnp.float32)       # (H, T, T)
        s = s - jnp.max(s, axis=-1, keepdims=True)
        e = jnp.exp(s)
        inv = pl.reciprocal(jnp.sum(e, axis=-1, keepdims=True), approx=True)
        a = (e * inv).astype(bf16)                               # (H, T, T)

        # ---- attention output, d_model-major, single out-projection ----
        o = jnp.einsum('hqk,khd->qhd', a, vh,
                       preferred_element_type=jnp.float32)       # (T, H, DH)
        o = o.reshape(T, Dm).astype(bf16)                        # (T, D)
        attn = jnp.dot(o, wo, preferred_element_type=jnp.float32) + bo

        # ---- residual + LayerNorm1 (f32) ----
        y = _layernorm(x + attn, g1, be1)

        # ---- FFN: Linear -> ReLU -> Linear (bf16 MXU, f32 accumulate) ----
        h1 = jnp.maximum(
            jnp.dot(y.astype(bf16), w1, preferred_element_type=jnp.float32) + b1,
            0.0)
        h2 = jnp.dot(h1.astype(bf16), w2,
                     preferred_element_type=jnp.float32) + b2

        # ---- residual + LayerNorm2 (f32) ----
        x = _layernorm(y + h2, g2, be2)

    out_ref[...] = x.astype(out_ref.dtype)


# ------------------------------ wrapper / glue --------------------------------
def _prepare_params(layer_params):
    """Stack per-layer params, fuse Wq|Wk|Wv, pack small vectors into one operand."""
    (wq, wk, wv, bq, bk, bv, wo, bo,
     w1, b1, w2, b2, g1, be1, g2, be2) = [jnp.stack(t) for t in zip(*layer_params)]
    bf16 = jnp.bfloat16
    width = 3 * D

    wqkv = jnp.concatenate([wq, wk, wv], axis=-1).astype(bf16)    # (L, D, 3D)

    def pad(v):                                                   # (L,1,k)->(L,1,3D)
        return jnp.pad(v, ((0, 0), (0, 0), (0, width - v.shape[-1])))

    vecs = jnp.concatenate([
        jnp.concatenate([bq, bk, bv], axis=-1),                   # row 0: [bq|bk|bv]
        pad(bo), pad(b1), pad(b2),                                # rows 1-3
        pad(g1), pad(be1), pad(g2), pad(be2),                     # rows 4-7
    ], axis=1).astype(jnp.float32)                                # (L, 8, 3D)

    return (wqkv, wo.astype(bf16), w1.astype(bf16), w2.astype(bf16), vecs)


def transformer_encoder(src, pos, layer_params):
    """TransformerEncoder.forward: stack of post-norm layers; final norm is None."""
    bsz, seq, dm = src.shape
    wqkv, wo, w1, w2, vecs = _prepare_params(layer_params)

    src_f = src.astype(jnp.float32)
    pos_f = pos.astype(jnp.float32)

    tok_spec = pl.BlockSpec((None, seq, dm), lambda b: (b, 0, 0))
    full = lambda a: pl.BlockSpec(a.shape, lambda b: (0, 0, 0))

    out = pl.pallas_call(
        encoder_kernel,
        out_shape=jax.ShapeDtypeStruct((bsz, seq, dm), jnp.float32),
        grid=(bsz,),
        in_specs=[tok_spec, tok_spec,
                  full(wqkv), full(wo), full(w1), full(w2), full(vecs)],
        out_specs=tok_spec,
        compiler_params=pltpu.CompilerParams(
            dimension_semantics=("parallel",)),
    )(src_f, pos_f, wqkv, wo, w1, w2, vecs)
    return out.astype(src.dtype)


# --------------------------- pure-JAX reference ------------------------------
def _ref_layer(x, p, params):
    (wq, wk, wv, bq, bk, bv, wo, bo, w1, b1, w2, b2,
     ln1g, ln1b, ln2g, ln2b) = params
    qk_in = x + p
    q = qk_in @ wq + bq
    k = qk_in @ wk + bk
    v = x @ wv + bv
    qh = q.reshape(-1, H, DH).transpose(1, 0, 2)
    kh = k.reshape(-1, H, DH).transpose(1, 0, 2)
    vh = v.reshape(-1, H, DH).transpose(1, 0, 2)
    s = jnp.einsum("hqd,hkd->hqk", qh, kh) / (DH ** 0.5)
    a = jax.nn.softmax(s, axis=-1)
    o = jnp.einsum("hqk,hkd->hqd", a, vh).transpose(1, 0, 2).reshape(-1, D)
    attn = o @ wo + bo
    y = _layernorm(x + attn, ln1g, ln1b)
    h2 = jnp.maximum(y @ w1 + b1, 0.0) @ w2 + b2
    return _layernorm(y + h2, ln2g, ln2b)


def _ref_encoder(src, pos, layer_params):
    out = src
    for params in layer_params:
        out = jnp.stack([_ref_layer(out[b], pos[b], params)
                         for b in range(out.shape[0])])
    return out


# ------------------------------ parameter init -------------------------------
def init_layer_params(key):
    ks = jax.random.split(key, 8)
    scale = 0.02
    wq = jax.random.normal(ks[0], (D, D), jnp.float32) * scale
    wk = jax.random.normal(ks[1], (D, D), jnp.float32) * scale
    wv = jax.random.normal(ks[2], (D, D), jnp.float32) * scale
    wo = jax.random.normal(ks[3], (D, D), jnp.float32) * scale
    w1 = jax.random.normal(ks[4], (D, FF), jnp.float32) * scale
    w2 = jax.random.normal(ks[5], (FF, D), jnp.float32) * scale
    bq = jax.random.normal(ks[6], (1, D), jnp.float32) * scale
    bk = jnp.zeros((1, D), jnp.float32)
    bv = jax.random.normal(ks[7], (1, D), jnp.float32) * scale
    bo = jnp.zeros((1, D), jnp.float32)
    b1 = jnp.zeros((1, FF), jnp.float32)
    b2 = jnp.zeros((1, D), jnp.float32)
    ln1g = jnp.ones((1, D), jnp.float32)
    ln1b = jnp.zeros((1, D), jnp.float32)
    ln2g = jnp.ones((1, D), jnp.float32)
    ln2b = jnp.zeros((1, D), jnp.float32)
    return [wq, wk, wv, bq, bk, bv, wo, bo, w1, b1, w2, b2, ln1g, ln1b, ln2g, ln2b]


# ----------------------------------- main -------------------------------------
if __name__ == "__main__":
    root = jax.random.PRNGKey(0)
    k_src, k_pos, k_par = jax.random.split(root, 3)
    src = jax.random.normal(k_src, (B, S, D), jnp.float32)
    pos = jax.random.normal(k_pos, (B, S, D), jnp.float32)
    layer_params = [init_layer_params(k) for k in jax.random.split(k_par, NUM_LAYERS)]

    out = transformer_encoder(src, pos, layer_params)
    out = jax.block_until_ready(out)

    ref = _ref_encoder(src, pos, layer_params)
    assert out.shape == src.shape and out.dtype == src.dtype
    # kernel uses bf16 MXU operands + approx softmax reciprocal; reference is pure f32
    assert jnp.allclose(out, ref, rtol=5e-3, atol=5e-3), "mismatch vs JAX reference"

    print("KERNEL_OK")
</pallas_src>

<mosaic_0001>
module attributes {stable_mosaic.version = 11 : i64} {
  func.func @encoder_kernel(%arg0: i32, %arg1: memref<1x8x32xf32, #tpu.memory_space<vmem>>, %arg2: memref<1x8x32xf32, #tpu.memory_space<vmem>>, %arg3: memref<2x32x96xbf16, #tpu.memory_space<vmem>>, %arg4: memref<2x32x32xbf16, #tpu.memory_space<vmem>>, %arg5: memref<2x32x64xbf16, #tpu.memory_space<vmem>>, %arg6: memref<2x64x32xbf16, #tpu.memory_space<vmem>>, %arg7: memref<2x8x96xf32, #tpu.memory_space<vmem>>, %arg8: memref<1x8x32xf32, #tpu.memory_space<vmem>>) attributes {dimension_semantics = [#tpu.dimension_semantics<parallel>], iteration_bounds = array<i64: 2>, scalar_prefetch = 0 : i64, scratch_operands = 0 : i64, tpu.core_type = #tpu.core_type<tc>, window_params = [{transform_indices = @transform_0, window_bounds = array<i64: 1, 8, 32>}, {transform_indices = @transform_1, window_bounds = array<i64: 1, 8, 32>}, {pipeline_mode = #tpu.pipeline_mode<synchronous>, transform_indices = @transform_2, window_bounds = array<i64: 2, 32, 96>}, {pipeline_mode = #tpu.pipeline_mode<synchronous>, transform_indices = @transform_3, window_bounds = array<i64: 2, 32, 32>}, {pipeline_mode = #tpu.pipeline_mode<synchronous>, transform_indices = @transform_4, window_bounds = array<i64: 2, 32, 64>}, {pipeline_mode = #tpu.pipeline_mode<synchronous>, transform_indices = @transform_5, window_bounds = array<i64: 2, 64, 32>}, {pipeline_mode = #tpu.pipeline_mode<synchronous>, transform_indices = @transform_6, window_bounds = array<i64: 2, 8, 96>}, {transform_indices = @transform_7, window_bounds = array<i64: 1, 8, 32>}]} {
    %c0 = arith.constant 0 : index
    %c0_0 = arith.constant 0 : index
    %c0_1 = arith.constant 0 : index
    %0 = vector.load %arg1[%c0, %c0_0, %c0_1] : memref<1x8x32xf32, #tpu.memory_space<vmem>>, vector<1x8x32xf32>
    %1 = vector.shape_cast %0 : vector<1x8x32xf32> to vector<8x32xf32>
    %c0_2 = arith.constant 0 : index
    %c0_3 = arith.constant 0 : index
    %c0_4 = arith.constant 0 : index
    %2 = vector.load %arg2[%c0_2, %c0_3, %c0_4] : memref<1x8x32xf32, #tpu.memory_space<vmem>>, vector<1x8x32xf32>
    %3 = vector.shape_cast %2 : vector<1x8x32xf32> to vector<8x32xf32>
    %c0_5 = arith.constant 0 : index
    %c0_6 = arith.constant 0 : index
    %c0_7 = arith.constant 0 : index
    %4 = vector.load %arg3[%c0_5, %c0_6, %c0_7] : memref<2x32x96xbf16, #tpu.memory_space<vmem>>, vector<1x32x96xbf16>
    %5 = vector.shape_cast %4 : vector<1x32x96xbf16> to vector<32x96xbf16>
    %c0_8 = arith.constant 0 : index
    %c0_9 = arith.constant 0 : index
    %c0_10 = arith.constant 0 : index
    %6 = vector.load %arg4[%c0_8, %c0_9, %c0_10] : memref<2x32x32xbf16, #tpu.memory_space<vmem>>, vector<1x32x32xbf16>
    %7 = vector.shape_cast %6 : vector<1x32x32xbf16> to vector<32x32xbf16>
    %c0_11 = arith.constant 0 : index
    %c0_12 = arith.constant 0 : index
    %c0_13 = arith.constant 0 : index
    %8 = vector.load %arg5[%c0_11, %c0_12, %c0_13] : memref<2x32x64xbf16, #tpu.memory_space<vmem>>, vector<1x32x64xbf16>
    %9 = vector.shape_cast %8 : vector<1x32x64xbf16> to vector<32x64xbf16>
    %c0_14 = arith.constant 0 : index
    %c0_15 = arith.constant 0 : index
    %c0_16 = arith.constant 0 : index
    %10 = vector.load %arg6[%c0_14, %c0_15, %c0_16] : memref<2x64x32xbf16, #tpu.memory_space<vmem>>, vector<1x64x32xbf16>
    %11 = vector.shape_cast %10 : vector<1x64x32xbf16> to vector<64x32xbf16>
    %c0_17 = arith.constant 0 : index
    %c0_18 = arith.constant 0 : index
    %c0_19 = arith.constant 0 : index
    %12 = vector.load %arg7[%c0_17, %c0_18, %c0_19] : memref<2x8x96xf32, #tpu.memory_space<vmem>>, vector<1x8x96xf32>
    %13 = vector.shape_cast %12 : vector<1x8x96xf32> to vector<8x96xf32>
    %14 = vector.extract_strided_slice %13 {offsets = [0, 0], sizes = [1, 64], strides = [1, 1]} : vector<8x96xf32> to vector<1x64xf32>
    %15 = vector.extract_strided_slice %13 {offsets = [0, 64], sizes = [1, 32], strides = [1, 1]} : vector<8x96xf32> to vector<1x32xf32>
    %16 = vector.extract_strided_slice %13 {offsets = [1, 0], sizes = [1, 32], strides = [1, 1]} : vector<8x96xf32> to vector<1x32xf32>
    %17 = vector.extract_strided_slice %13 {offsets = [2, 0], sizes = [1, 64], strides = [1, 1]} : vector<8x96xf32> to vector<1x64xf32>
    %18 = vector.extract_strided_slice %13 {offsets = [3, 0], sizes = [1, 32], strides = [1, 1]} : vector<8x96xf32> to vector<1x32xf32>
    %19 = vector.extract_strided_slice %13 {offsets = [4, 0], sizes = [1, 32], strides = [1, 1]} : vector<8x96xf32> to vector<1x32xf32>
    %20 = vector.extract_strided_slice %13 {offsets = [5, 0], sizes = [1, 32], strides = [1, 1]} : vector<8x96xf32> to vector<1x32xf32>
    %21 = vector.extract_strided_slice %13 {offsets = [6, 0], sizes = [1, 32], strides = [1, 1]} : vector<8x96xf32> to vector<1x32xf32>
    %22 = vector.extract_strided_slice %13 {offsets = [7, 0], sizes = [1, 32], strides = [1, 1]} : vector<8x96xf32> to vector<1x32xf32>
    %23 = arith.addf %1, %3 : vector<8x32xf32>
    %24 = arith.truncf %23 : vector<8x32xf32> to vector<8x32xbf16>
    %25 = vector.extract_strided_slice %5 {offsets = [0, 0], sizes = [32, 64], strides = [1, 1]} : vector<32x96xbf16> to vector<32x64xbf16>
    %cst = arith.constant dense<0.000000e+00> : vector<8x64xf32>
    %26 = tpu.matmul %24, %25, %cst {dimension_numbers = #tpu.dot_dimension_numbers<[1], [0], [0], [1], [0, 0, 1, 1], [], []>} : vector<8x32xbf16>, vector<32x64xbf16>, vector<8x64xf32> -> vector<8x64xf32>
    %27 = vector.broadcast %14 : vector<1x64xf32> to vector<8x64xf32>
    %28 = arith.addf %26, %27 : vector<8x64xf32>
    %29 = arith.truncf %1 : vector<8x32xf32> to vector<8x32xbf16>
    %30 = vector.extract_strided_slice %5 {offsets = [0, 64], sizes = [32, 32], strides = [1, 1]} : vector<32x96xbf16> to vector<32x32xbf16>
    %cst_20 = arith.constant dense<0.000000e+00> : vector<8x32xf32>
    %31 = tpu.matmul %29, %30, %cst_20 {dimension_numbers = #tpu.dot_dimension_numbers<[1], [0], [0], [1], [0, 0, 1, 1], [], []>} : vector<8x32xbf16>, vector<32x32xbf16>, vector<8x32xf32> -> vector<8x32xf32>
    %32 = vector.broadcast %15 : vector<1x32xf32> to vector<8x32xf32>
    %33 = arith.addf %31, %32 : vector<8x32xf32>
    %34 = vector.extract_strided_slice %28 {offsets = [0, 0], sizes = [8, 32], strides = [1, 1]} : vector<8x64xf32> to vector<8x32xf32>
    %cst_21 = arith.constant 0.353553385 : f32
    %35 = vector.broadcast %cst_21 : f32 to vector<8x32xf32>
    %36 = arith.mulf %34, %35 : vector<8x32xf32>
    %37 = arith.truncf %36 : vector<8x32xf32> to vector<8x32xbf16>
    %38 = vector.shape_cast %37 : vector<8x32xbf16> to vector<8x4x8xbf16>
    %39 = vector.extract_strided_slice %28 {offsets = [0, 32], sizes = [8, 32], strides = [1, 1]} : vector<8x64xf32> to vector<8x32xf32>
    %40 = arith.truncf %39 : vector<8x32xf32> to vector<8x32xbf16>
    %41 = vector.shape_cast %40 : vector<8x32xbf16> to vector<8x4x8xbf16>
    %42 = arith.truncf %33 : vector<8x32xf32> to vector<8x32xbf16>
    %43 = vector.shape_cast %42 : vector<8x32xbf16> to vector<8x4x8xbf16>
    "tpu.trace_start"() <{level = 10 : i32, message = "qhd,khd->hqk"}> : () -> ()
    %cst_22 = arith.constant dense<0.000000e+00> : vector<4x8x8xf32>
    %44 = tpu.matmul %38, %41, %cst_22 {dimension_numbers = #tpu.dot_dimension_numbers<[2], [2], [0], [0], [0, 1, 0, 0, 1, 0], [1], [1]>} : vector<8x4x8xbf16>, vector<8x4x8xbf16>, vector<4x8x8xf32> -> vector<4x8x8xf32>
    "tpu.trace_stop"() : () -> ()
    %cst_23 = arith.constant dense<0xFF800000> : vector<4x8xf32>
    %45 = vector.multi_reduction <maximumf>, %44, %cst_23 [2] : vector<4x8x8xf32> to vector<4x8xf32>
    %46 = vector.shape_cast %45 : vector<4x8xf32> to vector<4x8x1xf32>
    %47 = vector.broadcast %46 : vector<4x8x1xf32> to vector<4x8x8xf32>
    %48 = arith.subf %44, %47 : vector<4x8x8xf32>
    %49 = math.exp %48 : vector<4x8x8xf32>
    %cst_24 = arith.constant dense<0.000000e+00> : vector<4x8xf32>
    %50 = vector.multi_reduction <add>, %49, %cst_24 [2] : vector<4x8x8xf32> to vector<4x8xf32>
    %51 = vector.shape_cast %50 : vector<4x8xf32> to vector<4x8x1xf32>
    %52 = tpu.reciprocal %51 {approx = true} : vector<4x8x1xf32> -> vector<4x8x1xf32>
    %53 = vector.broadcast %52 : vector<4x8x1xf32> to vector<4x8x8xf32>
    %54 = arith.mulf %49, %53 : vector<4x8x8xf32>
    %55 = arith.truncf %54 : vector<4x8x8xf32> to vector<4x8x8xbf16>
    "tpu.trace_start"() <{level = 10 : i32, message = "hqk,khd->qhd"}> : () -> ()
    %cst_25 = arith.constant dense<0.000000e+00> : vector<4x8x8xf32>
    %56 = tpu.matmul %43, %55, %cst_25 {dimension_numbers = #tpu.dot_dimension_numbers<[0], [2], [2], [1], [0, 1, 0, 2, 1, 1], [1], [0]>} : vector<8x4x8xbf16>, vector<4x8x8xbf16>, vector<4x8x8xf32> -> vector<4x8x8xf32>
    %57 = tpu.transpose %56, [2, 0, 1] : vector<4x8x8xf32> -> vector<8x4x8xf32>
    "tpu.trace_stop"() : () -> ()
    %58 = vector.shape_cast %57 : vector<8x4x8xf32> to vector<8x32xf32>
    %59 = arith.truncf %58 : vector<8x32xf32> to vector<8x32xbf16>
    %cst_26 = arith.constant dense<0.000000e+00> : vector<8x32xf32>
    %60 = tpu.matmul %59, %7, %cst_26 {dimension_numbers = #tpu.dot_dimension_numbers<[1], [0], [0], [1], [0, 0, 1, 1], [], []>} : vector<8x32xbf16>, vector<32x32xbf16>, vector<8x32xf32> -> vector<8x32xf32>
    %61 = vector.broadcast %16 : vector<1x32xf32> to vector<8x32xf32>
    %62 = arith.addf %60, %61 : vector<8x32xf32>
    %63 = arith.addf %1, %62 : vector<8x32xf32>
    %cst_27 = arith.constant dense<0.000000e+00> : vector<8xf32>
    %64 = vector.multi_reduction <add>, %63, %cst_27 [1] : vector<8x32xf32> to vector<8xf32>
    %65 = vector.shape_cast %64 : vector<8xf32> to vector<8x1xf32>
    %cst_28 = arith.constant 3.200000e+01 : f32
    %66 = vector.broadcast %cst_28 : f32 to vector<8x1xf32>
    %67 = arith.divf %65, %66 : vector<8x1xf32>
    %68 = vector.broadcast %67 : vector<8x1xf32> to vector<8x32xf32>
    %69 = arith.subf %63, %68 : vector<8x32xf32>
    %70 = arith.mulf %69, %69 : vector<8x32xf32>
    %cst_29 = arith.constant dense<0.000000e+00> : vector<8xf32>
    %71 = vector.multi_reduction <add>, %70, %cst_29 [1] : vector<8x32xf32> to vector<8xf32>
    %72 = vector.shape_cast %71 : vector<8xf32> to vector<8x1xf32>
    %cst_30 = arith.constant 3.200000e+01 : f32
    %73 = vector.broadcast %cst_30 : f32 to vector<8x1xf32>
    %74 = arith.divf %72, %73 : vector<8x1xf32>
    %75 = vector.broadcast %67 : vector<8x1xf32> to vector<8x32xf32>
    %76 = arith.subf %63, %75 : vector<8x32xf32>
    %cst_31 = arith.constant 9.99999974E-6 : f32
    %77 = vector.broadcast %cst_31 : f32 to vector<8x1xf32>
    %78 = arith.addf %74, %77 : vector<8x1xf32>
    %79 = math.rsqrt %78 : vector<8x1xf32>
    %80 = vector.broadcast %79 : vector<8x1xf32> to vector<8x32xf32>
    %81 = arith.mulf %76, %80 : vector<8x32xf32>
    %82 = vector.broadcast %19 : vector<1x32xf32> to vector<8x32xf32>
    %83 = arith.mulf %81, %82 : vector<8x32xf32>
    %84 = vector.broadcast %20 : vector<1x32xf32> to vector<8x32xf32>
    %85 = arith.addf %83, %84 : vector<8x32xf32>
    %86 = arith.truncf %85 : vector<8x32xf32> to vector<8x32xbf16>
    %cst_32 = arith.constant dense<0.000000e+00> : vector<8x64xf32>
    %87 = tpu.matmul %86, %9, %cst_32 {dimension_numbers = #tpu.dot_dimension_numbers<[1], [0], [0], [1], [0, 0, 1, 1], [], []>} : vector<8x32xbf16>, vector<32x64xbf16>, vector<8x64xf32> -> vector<8x64xf32>
    %88 = vector.broadcast %17 : vector<1x64xf32> to vector<8x64xf32>
    %89 = arith.addf %87, %88 : vector<8x64xf32>
    %cst_33 = arith.constant 0.000000e+00 : f32
    %90 = vector.broadcast %cst_33 : f32 to vector<8x64xf32>
    %91 = arith.maximumf %89, %90 : vector<8x64xf32>
    %92 = arith.truncf %91 : vector<8x64xf32> to vector<8x64xbf16>
    %cst_34 = arith.constant dense<0.000000e+00> : vector<8x32xf32>
    %93 = tpu.matmul %92, %11, %cst_34 {dimension_numbers = #tpu.dot_dimension_numbers<[1], [0], [0], [1], [0, 0, 1, 1], [], []>} : vector<8x64xbf16>, vector<64x32xbf16>, vector<8x32xf32> -> vector<8x32xf32>
    %94 = vector.broadcast %18 : vector<1x32xf32> to vector<8x32xf32>
    %95 = arith.addf %93, %94 : vector<8x32xf32>
    %96 = arith.addf %85, %95 : vector<8x32xf32>
    %cst_35 = arith.constant dense<0.000000e+00> : vector<8xf32>
    %97 = vector.multi_reduction <add>, %96, %cst_35 [1] : vector<8x32xf32> to vector<8xf32>
    %98 = vector.shape_cast %97 : vector<8xf32> to vector<8x1xf32>
    %cst_36 = arith.constant 3.200000e+01 : f32
    %99 = vector.broadcast %cst_36 : f32 to vector<8x1xf32>
    %100 = arith.divf %98, %99 : vector<8x1xf32>
    %101 = vector.broadcast %100 : vector<8x1xf32> to vector<8x32xf32>
    %102 = arith.subf %96, %101 : vector<8x32xf32>
    %103 = arith.mulf %102, %102 : vector<8x32xf32>
    %cst_37 = arith.constant dense<0.000000e+00> : vector<8xf32>
    %104 = vector.multi_reduction <add>, %103, %cst_37 [1] : vector<8x32xf32> to vector<8xf32>
    %105 = vector.shape_cast %104 : vector<8xf32> to vector<8x1xf32>
    %cst_38 = arith.constant 3.200000e+01 : f32
    %106 = vector.broadcast %cst_38 : f32 to vector<8x1xf32>
    %107 = arith.divf %105, %106 : vector<8x1xf32>
    %108 = vector.broadcast %100 : vector<8x1xf32> to vector<8x32xf32>
    %109 = arith.subf %96, %108 : vector<8x32xf32>
    %cst_39 = arith.constant 9.99999974E-6 : f32
    %110 = vector.broadcast %cst_39 : f32 to vector<8x1xf32>
    %111 = arith.addf %107, %110 : vector<8x1xf32>
    %112 = math.rsqrt %111 : vector<8x1xf32>
    %113 = vector.broadcast %112 : vector<8x1xf32> to vector<8x32xf32>
    %114 = arith.mulf %109, %113 : vector<8x32xf32>
    %115 = vector.broadcast %21 : vector<1x32xf32> to vector<8x32xf32>
    %116 = arith.mulf %114, %115 : vector<8x32xf32>
    %117 = vector.broadcast %22 : vector<1x32xf32> to vector<8x32xf32>
    %118 = arith.addf %116, %117 : vector<8x32xf32>
    %c1 = arith.constant 1 : index
    %c0_40 = arith.constant 0 : index
    %c0_41 = arith.constant 0 : index
    %119 = vector.load %arg3[%c1, %c0_40, %c0_41] : memref<2x32x96xbf16, #tpu.memory_space<vmem>>, vector<1x32x96xbf16>
    %120 = vector.shape_cast %119 : vector<1x32x96xbf16> to vector<32x96xbf16>
    %c1_42 = arith.constant 1 : index
    %c0_43 = arith.constant 0 : index
    %c0_44 = arith.constant 0 : index
    %121 = vector.load %arg4[%c1_42, %c0_43, %c0_44] : memref<2x32x32xbf16, #tpu.memory_space<vmem>>, vector<1x32x32xbf16>
    %122 = vector.shape_cast %121 : vector<1x32x32xbf16> to vector<32x32xbf16>
    %c1_45 = arith.constant 1 : index
    %c0_46 = arith.constant 0 : index
    %c0_47 = arith.constant 0 : index
    %123 = vector.load %arg5[%c1_45, %c0_46, %c0_47] : memref<2x32x64xbf16, #tpu.memory_space<vmem>>, vector<1x32x64xbf16>
    %124 = vector.shape_cast %123 : vector<1x32x64xbf16> to vector<32x64xbf16>
    %c1_48 = arith.constant 1 : index
    %c0_49 = arith.constant 0 : index
    %c0_50 = arith.constant 0 : index
    %125 = vector.load %arg6[%c1_48, %c0_49, %c0_50] : memref<2x64x32xbf16, #tpu.memory_space<vmem>>, vector<1x64x32xbf16>
    %126 = vector.shape_cast %125 : vector<1x64x32xbf16> to vector<64x32xbf16>
    %c1_51 = arith.constant 1 : index
    %c0_52 = arith.constant 0 : index
    %c0_53 = arith.constant 0 : index
    %127 = vector.load %arg7[%c1_51, %c0_52, %c0_53] : memref<2x8x96xf32, #tpu.memory_space<vmem>>, vector<1x8x96xf32>
    %128 = vector.shape_cast %127 : vector<1x8x96xf32> to vector<8x96xf32>
    %129 = vector.extract_strided_slice %128 {offsets = [0, 0], sizes = [1, 64], strides = [1, 1]} : vector<8x96xf32> to vector<1x64xf32>
    %130 = vector.extract_strided_slice %128 {offsets = [0, 64], sizes = [1, 32], strides = [1, 1]} : vector<8x96xf32> to vector<1x32xf32>
    %131 = vector.extract_strided_slice %128 {offsets = [1, 0], sizes = [1, 32], strides = [1, 1]} : vector<8x96xf32> to vector<1x32xf32>
    %132 = vector.extract_strided_slice %128 {offsets = [2, 0], sizes = [1, 64], strides = [1, 1]} : vector<8x96xf32> to vector<1x64xf32>
    %133 = vector.extract_strided_slice %128 {offsets = [3, 0], sizes = [1, 32], strides = [1, 1]} : vector<8x96xf32> to vector<1x32xf32>
    %134 = vector.extract_strided_slice %128 {offsets = [4, 0], sizes = [1, 32], strides = [1, 1]} : vector<8x96xf32> to vector<1x32xf32>
    %135 = vector.extract_strided_slice %128 {offsets = [5, 0], sizes = [1, 32], strides = [1, 1]} : vector<8x96xf32> to vector<1x32xf32>
    %136 = vector.extract_strided_slice %128 {offsets = [6, 0], sizes = [1, 32], strides = [1, 1]} : vector<8x96xf32> to vector<1x32xf32>
    %137 = vector.extract_strided_slice %128 {offsets = [7, 0], sizes = [1, 32], strides = [1, 1]} : vector<8x96xf32> to vector<1x32xf32>
    %138 = arith.addf %118, %3 : vector<8x32xf32>
    %139 = arith.truncf %138 : vector<8x32xf32> to vector<8x32xbf16>
    %140 = vector.extract_strided_slice %120 {offsets = [0, 0], sizes = [32, 64], strides = [1, 1]} : vector<32x96xbf16> to vector<32x64xbf16>
    %cst_54 = arith.constant dense<0.000000e+00> : vector<8x64xf32>
    %141 = tpu.matmul %139, %140, %cst_54 {dimension_numbers = #tpu.dot_dimension_numbers<[1], [0], [0], [1], [0, 0, 1, 1], [], []>} : vector<8x32xbf16>, vector<32x64xbf16>, vector<8x64xf32> -> vector<8x64xf32>
    %142 = vector.broadcast %129 : vector<1x64xf32> to vector<8x64xf32>
    %143 = arith.addf %141, %142 : vector<8x64xf32>
    %144 = arith.truncf %118 : vector<8x32xf32> to vector<8x32xbf16>
    %145 = vector.extract_strided_slice %120 {offsets = [0, 64], sizes = [32, 32], strides = [1, 1]} : vector<32x96xbf16> to vector<32x32xbf16>
    %cst_55 = arith.constant dense<0.000000e+00> : vector<8x32xf32>
    %146 = tpu.matmul %144, %145, %cst_55 {dimension_numbers = #tpu.dot_dimension_numbers<[1], [0], [0], [1], [0, 0, 1, 1], [], []>} : vector<8x32xbf16>, vector<32x32xbf16>, vector<8x32xf32> -> vector<8x32xf32>
    %147 = vector.broadcast %130 : vector<1x32xf32> to vector<8x32xf32>
    %148 = arith.addf %146, %147 : vector<8x32xf32>
    %149 = vector.extract_strided_slice %143 {offsets = [0, 0], sizes = [8, 32], strides = [1, 1]} : vector<8x64xf32> to vector<8x32xf32>
    %cst_56 = arith.constant 0.353553385 : f32
    %150 = vector.broadcast %cst_56 : f32 to vector<8x32xf32>
    %151 = arith.mulf %149, %150 : vector<8x32xf32>
    %152 = arith.truncf %151 : vector<8x32xf32> to vector<8x32xbf16>
    %153 = vector.shape_cast %152 : vector<8x32xbf16> to vector<8x4x8xbf16>
    %154 = vector.extract_strided_slice %143 {offsets = [0, 32], sizes = [8, 32], strides = [1, 1]} : vector<8x64xf32> to vector<8x32xf32>
    %155 = arith.truncf %154 : vector<8x32xf32> to vector<8x32xbf16>
    %156 = vector.shape_cast %155 : vector<8x32xbf16> to vector<8x4x8xbf16>
    %157 = arith.truncf %148 : vector<8x32xf32> to vector<8x32xbf16>
    %158 = vector.shape_cast %157 : vector<8x32xbf16> to vector<8x4x8xbf16>
    "tpu.trace_start"() <{level = 10 : i32, message = "qhd,khd->hqk"}> : () -> ()
    %cst_57 = arith.constant dense<0.000000e+00> : vector<4x8x8xf32>
    %159 = tpu.matmul %153, %156, %cst_57 {dimension_numbers = #tpu.dot_dimension_numbers<[2], [2], [0], [0], [0, 1, 0, 0, 1, 0], [1], [1]>} : vector<8x4x8xbf16>, vector<8x4x8xbf16>, vector<4x8x8xf32> -> vector<4x8x8xf32>
    "tpu.trace_stop"() : () -> ()
    %cst_58 = arith.constant dense<0xFF800000> : vector<4x8xf32>
    %160 = vector.multi_reduction <maximumf>, %159, %cst_58 [2] : vector<4x8x8xf32> to vector<4x8xf32>
    %161 = vector.shape_cast %160 : vector<4x8xf32> to vector<4x8x1xf32>
    %162 = vector.broadcast %161 : vector<4x8x1xf32> to vector<4x8x8xf32>
    %163 = arith.subf %159, %162 : vector<4x8x8xf32>
    %164 = math.exp %163 : vector<4x8x8xf32>
    %cst_59 = arith.constant dense<0.000000e+00> : vector<4x8xf32>
    %165 = vector.multi_reduction <add>, %164, %cst_59 [2] : vector<4x8x8xf32> to vector<4x8xf32>
    %166 = vector.shape_cast %165 : vector<4x8xf32> to vector<4x8x1xf32>
    %167 = tpu.reciprocal %166 {approx = true} : vector<4x8x1xf32> -> vector<4x8x1xf32>
    %168 = vector.broadcast %167 : vector<4x8x1xf32> to vector<4x8x8xf32>
    %169 = arith.mulf %164, %168 : vector<4x8x8xf32>
    %170 = arith.truncf %169 : vector<4x8x8xf32> to vector<4x8x8xbf16>
    "tpu.trace_start"() <{level = 10 : i32, message = "hqk,khd->qhd"}> : () -> ()
    %cst_60 = arith.constant dense<0.000000e+00> : vector<4x8x8xf32>
    %171 = tpu.matmul %158, %170, %cst_60 {dimension_numbers = #tpu.dot_dimension_numbers<[0], [2], [2], [1], [0, 1, 0, 2, 1, 1], [1], [0]>} : vector<8x4x8xbf16>, vector<4x8x8xbf16>, vector<4x8x8xf32> -> vector<4x8x8xf32>
    %172 = tpu.transpose %171, [2, 0, 1] : vector<4x8x8xf32> -> vector<8x4x8xf32>
    "tpu.trace_stop"() : () -> ()
    %173 = vector.shape_cast %172 : vector<8x4x8xf32> to vector<8x32xf32>
    %174 = arith.truncf %173 : vector<8x32xf32> to vector<8x32xbf16>
    %cst_61 = arith.constant dense<0.000000e+00> : vector<8x32xf32>
    %175 = tpu.matmul %174, %122, %cst_61 {dimension_numbers = #tpu.dot_dimension_numbers<[1], [0], [0], [1], [0, 0, 1, 1], [], []>} : vector<8x32xbf16>, vector<32x32xbf16>, vector<8x32xf32> -> vector<8x32xf32>
    %176 = vector.broadcast %131 : vector<1x32xf32> to vector<8x32xf32>
    %177 = arith.addf %175, %176 : vector<8x32xf32>
    %178 = arith.addf %118, %177 : vector<8x32xf32>
    %cst_62 = arith.constant dense<0.000000e+00> : vector<8xf32>
    %179 = vector.multi_reduction <add>, %178, %cst_62 [1] : vector<8x32xf32> to vector<8xf32>
    %180 = vector.shape_cast %179 : vector<8xf32> to vector<8x1xf32>
    %cst_63 = arith.constant 3.200000e+01 : f32
    %181 = vector.broadcast %cst_63 : f32 to vector<8x1xf32>
    %182 = arith.divf %180, %181 : vector<8x1xf32>
    %183 = vector.broadcast %182 : vector<8x1xf32> to vector<8x32xf32>
    %184 = arith.subf %178, %183 : vector<8x32xf32>
    %185 = arith.mulf %184, %184 : vector<8x32xf32>
    %cst_64 = arith.constant dense<0.000000e+00> : vector<8xf32>
    %186 = vector.multi_reduction <add>, %185, %cst_64 [1] : vector<8x32xf32> to vector<8xf32>
    %187 = vector.shape_cast %186 : vector<8xf32> to vector<8x1xf32>
    %cst_65 = arith.constant 3.200000e+01 : f32
    %188 = vector.broadcast %cst_65 : f32 to vector<8x1xf32>
    %189 = arith.divf %187, %188 : vector<8x1xf32>
    %190 = vector.broadcast %182 : vector<8x1xf32> to vector<8x32xf32>
    %191 = arith.subf %178, %190 : vector<8x32xf32>
    %cst_66 = arith.constant 9.99999974E-6 : f32
    %192 = vector.broadcast %cst_66 : f32 to vector<8x1xf32>
    %193 = arith.addf %189, %192 : vector<8x1xf32>
    %194 = math.rsqrt %193 : vector<8x1xf32>
    %195 = vector.broadcast %194 : vector<8x1xf32> to vector<8x32xf32>
    %196 = arith.mulf %191, %195 : vector<8x32xf32>
    %197 = vector.broadcast %134 : vector<1x32xf32> to vector<8x32xf32>
    %198 = arith.mulf %196, %197 : vector<8x32xf32>
    %199 = vector.broadcast %135 : vector<1x32xf32> to vector<8x32xf32>
    %200 = arith.addf %198, %199 : vector<8x32xf32>
    %201 = arith.truncf %200 : vector<8x32xf32> to vector<8x32xbf16>
    %cst_67 = arith.constant dense<0.000000e+00> : vector<8x64xf32>
    %202 = tpu.matmul %201, %124, %cst_67 {dimension_numbers = #tpu.dot_dimension_numbers<[1], [0], [0], [1], [0, 0, 1, 1], [], []>} : vector<8x32xbf16>, vector<32x64xbf16>, vector<8x64xf32> -> vector<8x64xf32>
    %203 = vector.broadcast %132 : vector<1x64xf32> to vector<8x64xf32>
    %204 = arith.addf %202, %203 : vector<8x64xf32>
    %cst_68 = arith.constant 0.000000e+00 : f32
    %205 = vector.broadcast %cst_68 : f32 to vector<8x64xf32>
    %206 = arith.maximumf %204, %205 : vector<8x64xf32>
    %207 = arith.truncf %206 : vector<8x64xf32> to vector<8x64xbf16>
    %cst_69 = arith.constant dense<0.000000e+00> : vector<8x32xf32>
    %208 = tpu.matmul %207, %126, %cst_69 {dimension_numbers = #tpu.dot_dimension_numbers<[1], [0], [0], [1], [0, 0, 1, 1], [], []>} : vector<8x64xbf16>, vector<64x32xbf16>, vector<8x32xf32> -> vector<8x32xf32>
    %209 = vector.broadcast %133 : vector<1x32xf32> to vector<8x32xf32>
    %210 = arith.addf %208, %209 : vector<8x32xf32>
    %211 = arith.addf %200, %210 : vector<8x32xf32>
    %cst_70 = arith.constant dense<0.000000e+00> : vector<8xf32>
    %212 = vector.multi_reduction <add>, %211, %cst_70 [1] : vector<8x32xf32> to vector<8xf32>
    %213 = vector.shape_cast %212 : vector<8xf32> to vector<8x1xf32>
    %cst_71 = arith.constant 3.200000e+01 : f32
    %214 = vector.broadcast %cst_71 : f32 to vector<8x1xf32>
    %215 = arith.divf %213, %214 : vector<8x1xf32>
    %216 = vector.broadcast %215 : vector<8x1xf32> to vector<8x32xf32>
    %217 = arith.subf %211, %216 : vector<8x32xf32>
    %218 = arith.mulf %217, %217 : vector<8x32xf32>
    %cst_72 = arith.constant dense<0.000000e+00> : vector<8xf32>
    %219 = vector.multi_reduction <add>, %218, %cst_72 [1] : vector<8x32xf32> to vector<8xf32>
    %220 = vector.shape_cast %219 : vector<8xf32> to vector<8x1xf32>
    %cst_73 = arith.constant 3.200000e+01 : f32
    %221 = vector.broadcast %cst_73 : f32 to vector<8x1xf32>
    %222 = arith.divf %220, %221 : vector<8x1xf32>
    %223 = vector.broadcast %215 : vector<8x1xf32> to vector<8x32xf32>
    %224 = arith.subf %211, %223 : vector<8x32xf32>
    %cst_74 = arith.constant 9.99999974E-6 : f32
    %225 = vector.broadcast %cst_74 : f32 to vector<8x1xf32>
    %226 = arith.addf %222, %225 : vector<8x1xf32>
    %227 = math.rsqrt %226 : vector<8x1xf32>
    %228 = vector.broadcast %227 : vector<8x1xf32> to vector<8x32xf32>
    %229 = arith.mulf %224, %228 : vector<8x32xf32>
    %230 = vector.broadcast %136 : vector<1x32xf32> to vector<8x32xf32>
    %231 = arith.mulf %229, %230 : vector<8x32xf32>
    %232 = vector.broadcast %137 : vector<1x32xf32> to vector<8x32xf32>
    %233 = arith.addf %231, %232 : vector<8x32xf32>
    %c0_75 = arith.constant 0 : index
    %c0_76 = arith.constant 0 : index
    %c0_77 = arith.constant 0 : index
    %234 = vector.load %arg8[%c0_75, %c0_76, %c0_77] : memref<1x8x32xf32, #tpu.memory_space<vmem>>, vector<1x8x32xf32>
    %235 = vector.shape_cast %234 : vector<1x8x32xf32> to vector<8x32xf32>
    %236 = vector.shape_cast %233 : vector<8x32xf32> to vector<1x8x32xf32>
    tpu.vector_store %arg8[%c0_75, %c0_76, %c0_77], %236 {strides = array<i32>} : memref<1x8x32xf32, #tpu.memory_space<vmem>>, vector<1x8x32xf32>,
    return
  }
  func.func @transform_0(%arg0: i32) -> (i32, i32, i32) {
    %c0_i32 = arith.constant 0 : i32
    %c0_i32_0 = arith.constant 0 : i32
    %c0_i32_1 = arith.constant 0 : i32
    return %arg0, %c0_i32, %c0_i32_0 : i32, i32, i32
  }
  func.func @transform_1(%arg0: i32) -> (i32, i32, i32) {
    %c0_i32 = arith.constant 0 : i32
    %c0_i32_0 = arith.constant 0 : i32
    %c0_i32_1 = arith.constant 0 : i32
    return %arg0, %c0_i32, %c0_i32_0 : i32, i32, i32
  }
  func.func @transform_2(%arg0: i32) -> (i32, i32, i32) {
    %c0_i32 = arith.constant 0 : i32
    %c0_i32_0 = arith.constant 0 : i32
    %c0_i32_1 = arith.constant 0 : i32
    %c0_i32_2 = arith.constant 0 : i32
    return %c0_i32, %c0_i32_0, %c0_i32_1 : i32, i32, i32
  }
  func.func @transform_3(%arg0: i32) -> (i32, i32, i32) {
    %c0_i32 = arith.constant 0 : i32
    %c0_i32_0 = arith.constant 0 : i32
    %c0_i32_1 = arith.constant 0 : i32
    %c0_i32_2 = arith.constant 0 : i32
    return %c0_i32, %c0_i32_0, %c0_i32_1 : i32, i32, i32
  }
  func.func @transform_4(%arg0: i32) -> (i32, i32, i32) {
    %c0_i32 = arith.constant 0 : i32
    %c0_i32_0 = arith.constant 0 : i32
    %c0_i32_1 = arith.constant 0 : i32
    %c0_i32_2 = arith.constant 0 : i32
    return %c0_i32, %c0_i32_0, %c0_i32_1 : i32, i32, i32
  }
  func.func @transform_5(%arg0: i32) -> (i32, i32, i32) {
    %c0_i32 = arith.constant 0 : i32
    %c0_i32_0 = arith.constant 0 : i32
    %c0_i32_1 = arith.constant 0 : i32
    %c0_i32_2 = arith.constant 0 : i32
    return %c0_i32, %c0_i32_0, %c0_i32_1 : i32, i32, i32
  }
  func.func @transform_6(%arg0: i32) -> (i32, i32, i32) {
    %c0_i32 = arith.constant 0 : i32
    %c0_i32_0 = arith.constant 0 : i32
    %c0_i32_1 = arith.constant 0 : i32
    %c0_i32_2 = arith.constant 0 : i32
    return %c0_i32, %c0_i32_0, %c0_i32_1 : i32, i32, i32
  }
  func.func @transform_7(%arg0: i32) -> (i32, i32, i32) {
    %c0_i32 = arith.constant 0 : i32
    %c0_i32_0 = arith.constant 0 : i32
    %c0_i32_1 = arith.constant 0 : i32
    return %arg0, %c0_i32, %c0_i32_0 : i32, i32, i32
  }
}

</mosaic_0001>

<llo_original>
// kernel: tpu_custom_call.1
$region0: #{tpu_custom_call.1}
  #allocation0 [shape = 'u32[]', space=smem, size = 0x4, offset = 0x4, fixed_abs, tag = 'smem constant byte address 0x4 - core index']
  #allocation1 [shape = 'u32[72,128]{1,0:T(1,128)}', space=vmem, size = 0x9000, scoped, tag = 'internal scratch']
  %s0 = inlined_call_operand.hbm [shape: f32[2,8,32], index: 0, kind: input, shape index: {}]
  %s1 = inlined_call_operand.hbm [shape: f32[2,8,32], index: 1, kind: input, shape index: {}]
  %s2 = inlined_call_operand.vmem [shape: bf16[2,32,96], index: 2, kind: input, shape index: {}]
  %s3 = inlined_call_operand.vmem [shape: bf16[2,32,32], index: 3, kind: input, shape index: {}]
  %s4 = inlined_call_operand.vmem [shape: bf16[2,32,64], index: 4, kind: input, shape index: {}]
  %s5 = inlined_call_operand.vmem [shape: bf16[2,64,32], index: 5, kind: input, shape index: {}]
  %s6 = inlined_call_operand.hbm [shape: f32[2,8,96], index: 6, kind: input, shape index: {}]
  %s7 = inlined_call_operand.hbm [shape: f32[2,8,32], index: 7, kind: output, shape index: {}]
  %s8 = sld [smem:[#allocation0]]
  $region73: #{tpu_custom_call.1} parent=0
    _
  %s10 = ssub.s32 1, %s8
  %s11 = scalar_select 0, %s10, %s8
  $region1: #{tpu_custom_call.1} parent=0
    #allocation2 [shape = 'u8[8192]{0}', space=vmem, size = 0x2000, scoped, tag = 'input window, operand 0']
    #allocation3 [shape = 's32[2]{0}', space=sflag, size = 0x8, scoped, tag = 'scoped memory for tpu_custom_call.1']
    #allocation4 [shape = 's32[2]{0}', space=sflag, size = 0x8, scoped, tag = 'scoped memory for tpu_custom_call.1']
    #allocation5 [shape = 'u8[8192]{0}', space=vmem, size = 0x2000, scoped, tag = 'input window, operand 1']
    #allocation6 [shape = 's32[2]{0}', space=sflag, size = 0x8, scoped, tag = 'scoped memory for tpu_custom_call.1']
    #allocation7 [shape = 'u8[8192]{0}', space=vmem, size = 0x2000, scoped, tag = 'input window, operand 6, single buffered']
    #allocation8 [shape = 'u8[8192]{0}', space=vmem, size = 0x2000, scoped, tag = 'output window, operand 0']
    %12 = vsyncpa [#allocation3], 0
    %s13 = scalar_lea.sflag [#allocation3], 1
    %14 = vsyncpa %s13, 0
    %15 = vsyncpa [#allocation6], 0
    %s16 = scalar_lea.sflag [#allocation6], 1
    %17 = vsyncpa %s16, 0
    %18 = vsyncpa [#allocation4], 0
    %s19 = scalar_lea.sflag [#allocation4], 1
    %20 = vsyncpa %s19, 0
    loop: start=0, step=1, limit=4
    $region2: #{tpu_custom_call.1} parent=1 // loop_pre_header
      _
    $region3: #{tpu_custom_call.1} parent=1 // loop_header
      %s22 = sphi 0, %s26
      %p23 = scmp.ge.s32.totalorder %s22, 4
      %s32 = sphi 0, %s34
      %s35 = sphi 0, %s32
      %s36 = sphi 0, %s35
      %s52 = sphi 0, %s36
      %s58 = sphi 0, %s60
      %s61 = sphi 0, %s58
      %s62 = sphi 0, %s61
      %s78 = sphi 0, %s62
      %s82 = sphi 0, %s82
      %s84 = sphi 0, %s82
      %s85 = sphi 0, %s84
      %s99 = sphi 0, %s85
      %s103 = sphi 0, %s103
      %s105 = sphi 0, %s103
      %s106 = sphi 0, %s105
      %s120 = sphi 0, %s106
      %s124 = sphi 0, %s124
      %s126 = sphi 0, %s124
      %s127 = sphi 0, %s126
      %s141 = sphi 0, %s127
      %s145 = sphi 0, %s145
      %s147 = sphi 0, %s145
      %s148 = sphi 0, %s147
      %s162 = sphi 0, %s148
      %s166 = sphi 0, %s166
      %s168 = sphi 0, %s166
      %s169 = sphi 0, %s168
      %s183 = sphi 0, %s169
      %s189 = sphi 0, %s191
      %s192 = sphi 0, %s189
      %s193 = sphi 0, %s192
      %s209 = sphi 0, %s193
    $region4: #{tpu_custom_call.1} parent=1 // loop_header_branch
      %25 = sbr.rel (%p23) target = $region8
    $region5: #{tpu_custom_call.1} parent=1 // loop_body
      %s27 = ssub.s32 %s22, 1
      %s28 = ssub.s32 %s22, 2
      %s29 = sadd.s32 %s22, 1
      %s30 = ssub.s32 %s22, %s29
      %p31 = scmp.eq.s32.totalorder %s30, 0
      %s33 = sadd.s32 %s32, 1
      %s34 = scalar_select %p31, %s32, %s33
      %p37 = pneg %p31
      %p38 = scmp.eq.s32.totalorder %s22, 1
      %p39 = por %p37, %p38
      %p40 = scmp.ne.s32.totalorder %s32, %s35
      %p41 = scmp.eq.s32.totalorder %s22, 0
      %p42 = por %p40, %p41
      %p43 = scmp.ne.s32.totalorder %s32, %s35
      %p44 = scmp.eq.s32.totalorder %s27, 1
      %p45 = por %p43, %p44
      %p46 = scmp.ne.s32.totalorder %s35, %s36
      %p47 = scmp.eq.s32.totalorder %s27, 0
      %p48 = por %p46, %p47
      %p49 = scmp.ne.s32.totalorder %s35, %s36
      %p50 = scmp.eq.s32.totalorder %s28, 1
      %p51 = por %p49, %p50
      %p53 = scmp.ne.s32.totalorder %s36, %s52
      %p54 = scmp.eq.s32.totalorder %s28, 0
      %p55 = por %p53, %p54
      %s56 = ssub.s32 %s22, %s29
      %p57 = scmp.eq.s32.totalorder %s56, 0
      %s59 = sadd.s32 %s58, 1
      %s60 = scalar_select %p57, %s58, %s59
      %p63 = pneg %p57
      %p64 = scmp.eq.s32.totalorder %s22, 1
      %p65 = por %p63, %p64
      %p66 = scmp.ne.s32.totalorder %s58, %s61
      %p67 = scmp.eq.s32.totalorder %s22, 0
      %p68 = por %p66, %p67
      %p69 = scmp.ne.s32.totalorder %s58, %s61
      %p70 = scmp.eq.s32.totalorder %s27, 1
      %p71 = por %p69, %p70
      %p72 = scmp.ne.s32.totalorder %s61, %s62
      %p73 = scmp.eq.s32.totalorder %s27, 0
      %p74 = por %p72, %p73
      %p75 = scmp.ne.s32.totalorder %s61, %s62
      %p76 = scmp.eq.s32.totalorder %s28, 1
      %p77 = por %p75, %p76
      %p79 = scmp.ne.s32.totalorder %s62, %s78
      %p80 = scmp.eq.s32.totalorder %s28, 0
      %p81 = por %p79, %p80
      %s83 = sadd.s32 %s82, 1
      %p86 = scmp.eq.s32.totalorder %s22, 1
      %p87 = scmp.ne.s32.totalorder %s82, %s84
      %p88 = scmp.eq.s32.totalorder %s22, 0
      %p89 = por %p87, %p88
      %p90 = scmp.ne.s32.totalorder %s82, %s84
      %p91 = scmp.eq.s32.totalorder %s27, 1
      %p92 = por %p90, %p91
      %p93 = scmp.ne.s32.totalorder %s84, %s85
      %p94 = scmp.eq.s32.totalorder %s27, 0
      %p95 = por %p93, %p94
      %p96 = scmp.ne.s32.totalorder %s84, %s85
      %p97 = scmp.eq.s32.totalorder %s28, 1
      %p98 = por %p96, %p97
      %p100 = scmp.ne.s32.totalorder %s85, %s99
      %p101 = scmp.eq.s32.totalorder %s28, 0
      %p102 = por %p100, %p101
      %s104 = sadd.s32 %s103, 1
      %p107 = scmp.eq.s32.totalorder %s22, 1
      %p108 = scmp.ne.s32.totalorder %s103, %s105
      %p109 = scmp.eq.s32.totalorder %s22, 0
      %p110 = por %p108, %p109
      %p111 = scmp.ne.s32.totalorder %s103, %s105
      %p112 = scmp.eq.s32.totalorder %s27, 1
      %p113 = por %p111, %p112
      %p114 = scmp.ne.s32.totalorder %s105, %s106
      %p115 = scmp.eq.s32.totalorder %s27, 0
      %p116 = por %p114, %p115
      %p117 = scmp.ne.s32.totalorder %s105, %s106
      %p118 = scmp.eq.s32.totalorder %s28, 1
      %p119 = por %p117, %p118
      %p121 = scmp.ne.s32.totalorder %s106, %s120
      %p122 = scmp.eq.s32.totalorder %s28, 0
      %p123 = por %p121, %p122
      %s125 = sadd.s32 %s124, 1
      %p128 = scmp.eq.s32.totalorder %s22, 1
      %p129 = scmp.ne.s32.totalorder %s124, %s126
      %p130 = scmp.eq.s32.totalorder %s22, 0
      %p131 = por %p129, %p130
      %p132 = scmp.ne.s32.totalorder %s124, %s126
      %p133 = scmp.eq.s32.totalorder %s27, 1
      %p134 = por %p132, %p133
      %p135 = scmp.ne.s32.totalorder %s126, %s127
      %p136 = scmp.eq.s32.totalorder %s27, 0
      %p137 = por %p135, %p136
      %p138 = scmp.ne.s32.totalorder %s126, %s127
      %p139 = scmp.eq.s32.totalorder %s28, 1
      %p140 = por %p138, %p139
      %p142 = scmp.ne.s32.totalorder %s127, %s141
      %p143 = scmp.eq.s32.totalorder %s28, 0
      %p144 = por %p142, %p143
      %s146 = sadd.s32 %s145, 1
      %p149 = scmp.eq.s32.totalorder %s22, 1
      %p150 = scmp.ne.s32.totalorder %s145, %s147
      %p151 = scmp.eq.s32.totalorder %s22, 0
      %p152 = por %p150, %p151
      %p153 = scmp.ne.s32.totalorder %s145, %s147
      %p154 = scmp.eq.s32.totalorder %s27, 1
      %p155 = por %p153, %p154
      %p156 = scmp.ne.s32.totalorder %s147, %s148
      %p157 = scmp.eq.s32.totalorder %s27, 0
      %p158 = por %p156, %p157
      %p159 = scmp.ne.s32.totalorder %s147, %s148
      %p160 = scmp.eq.s32.totalorder %s28, 1
      %p161 = por %p159, %p160
      %p163 = scmp.ne.s32.totalorder %s148, %s162
      %p164 = scmp.eq.s32.totalorder %s28, 0
      %p165 = por %p163, %p164
      %s167 = sadd.s32 %s166, 1
      %p170 = scmp.eq.s32.totalorder %s22, 1
      %p171 = scmp.ne.s32.totalorder %s166, %s168
      %p172 = scmp.eq.s32.totalorder %s22, 0
      %p173 = por %p171, %p172
      %p174 = scmp.ne.s32.totalorder %s166, %s168
      %p175 = scmp.eq.s32.totalorder %s27, 1
      %p176 = por %p174, %p175
      %p177 = scmp.ne.s32.totalorder %s168, %s169
      %p178 = scmp.eq.s32.totalorder %s27, 0
      %p179 = por %p177, %p178
      %p180 = scmp.ne.s32.totalorder %s168, %s169
      %p181 = scmp.eq.s32.totalorder %s28, 1
      %p182 = por %p180, %p181
      %p184 = scmp.ne.s32.totalorder %s169, %s183
      %p185 = scmp.eq.s32.totalorder %s28, 0
      %p186 = por %p184, %p185
      %s187 = ssub.s32 %s22, %s29
      %p188 = scmp.eq.s32.totalorder %s187, 0
      %s190 = sadd.s32 %s189, 1
      %s191 = scalar_select %p188, %s189, %s190
      %p194 = pneg %p188
      %p195 = scmp.eq.s32.totalorder %s22, 1
      %p196 = por %p194, %p195
      %p197 = scmp.ne.s32.totalorder %s189, %s192
      %p198 = scmp.eq.s32.totalorder %s22, 0
      %p199 = por %p197, %p198
      %p200 = scmp.ne.s32.totalorder %s189, %s192
      %p201 = scmp.eq.s32.totalorder %s27, 1
      %p202 = por %p200, %p201
      %p203 = scmp.ne.s32.totalorder %s192, %s193
      %p204 = scmp.eq.s32.totalorder %s27, 0
      %p205 = por %p203, %p204
      %p206 = scmp.ne.s32.totalorder %s192, %s193
      %p207 = scmp.eq.s32.totalorder %s28, 1
      %p208 = por %p206, %p207
      %p210 = scmp.ne.s32.totalorder %s193, %s209
      %p211 = scmp.eq.s32.totalorder %s28, 0
      %p212 = por %p210, %p211
      %p213 = scmp.le.s32.totalorder 1, %s22
      %p214 = scmp.lt.s32.totalorder %s22, 3
      %p215 = pnand %p213, %p214
      %p216 = pneg %p215
      // Predicated region
      $region9: #{tpu_custom_call.1} parent=5 // pred_check
        _
      $region10: #{tpu_custom_call.1} parent=5 // pred_check_branch
        %218 = sbr.rel (%p215) target = $region12
      $region11: #{tpu_custom_call.1} parent=5 // pred_region
        %s219 = ssub.s32 %s22, 1
        // Predicated region
        $region13: #{tpu_custom_call.1} parent=11 // pred_check
          %p220 = pneg %p95
        $region14: #{tpu_custom_call.1} parent=11 // pred_check_branch
          %222 = sbr.rel (%p220) target = $region16
        $region15: #{tpu_custom_call.1} parent=11 // pred_region
          _
        $region16: #{tpu_custom_call.1} parent=11 // pred_fallthru
          _
        // Predicated region
        $region17: #{tpu_custom_call.1} parent=11 // pred_check
          %p223 = pneg %p116
        $region18: #{tpu_custom_call.1} parent=11 // pred_check_branch
          %225 = sbr.rel (%p223) target = $region20
        $region19: #{tpu_custom_call.1} parent=11 // pred_region
          _
        $region20: #{tpu_custom_call.1} parent=11 // pred_fallthru
          _
        // Predicated region
        $region21: #{tpu_custom_call.1} parent=11 // pred_check
          %p226 = pneg %p137
        $region22: #{tpu_custom_call.1} parent=11 // pred_check_branch
          %228 = sbr.rel (%p226) target = $region24
        $region23: #{tpu_custom_call.1} parent=11 // pred_region
          _
        $region24: #{tpu_custom_call.1} parent=11 // pred_fallthru
          _
        // Predicated region
        $region25: #{tpu_custom_call.1} parent=11 // pred_check
          %p229 = pneg %p158
        $region26: #{tpu_custom_call.1} parent=11 // pred_check_branch
          %231 = sbr.rel (%p229) target = $region28
        $region27: #{tpu_custom_call.1} parent=11 // pred_region
          _
        $region28: #{tpu_custom_call.1} parent=11 // pred_fallthru
          _
        // Predicated region
        $region29: #{tpu_custom_call.1} parent=11 // pred_check
          %p232 = pneg %p179
        $region30: #{tpu_custom_call.1} parent=11 // pred_check_branch
          %234 = sbr.rel (%p232) target = $region32
        $region31: #{tpu_custom_call.1} parent=11 // pred_region
          %236 = vsyncadd [#allocation6], 0
          %s237 = sshll.u32 %s6, 4
          %s238 = int_to_ptr.hbm [resolvable:$true] %s237
          %s239 = sshll.u32 [#allocation7], 4
          %s240 = int_to_ptr.vmem [resolvable:$true] %s239
          %245 = dma.hbm_to_vmem [thread:$0]  %s238, 256, %s240, [#allocation6], 128, 128, 8
        $region32: #{tpu_custom_call.1} parent=11 // pred_fallthru
          _
      $region12: #{tpu_custom_call.1} parent=5 // pred_fallthru
        _
      %p246 = scmp.lt.s32.totalorder %s22, 2
      // Predicated region
      $region33: #{tpu_custom_call.1} parent=5 // pred_check
        %p247 = pneg %p246
      $region34: #{tpu_custom_call.1} parent=5 // pred_check_branch
        %249 = sbr.rel (%p247) target = $region36
      $region35: #{tpu_custom_call.1} parent=5 // pred_region
        // Predicated region
        $region37: #{tpu_custom_call.1} parent=35 // pred_check
          %p250 = pneg %p42
        $region38: #{tpu_custom_call.1} parent=35 // pred_check_branch
          %252 = sbr.rel (%p250) target = $region40
        $region39: #{tpu_custom_call.1} parent=35 // pred_region
          %s253 = sand.u32 %s32, 1
          %s254 = scalar_lea.sflag [#allocation3], %s253
          %s255 = sand.u32 %s32, 1
          %s256 = smul.addr %s255, 8
          %s257 = scalar_lea.vmem [#allocation2], %s256
          %259 = vsyncadd %s254, 0
          %s260 = smul.addr %s22, 8
          %s261 = scalar_lea.hbm %s0, %s260
          %s263 = sshll.u32 %s261, 4
          %s264 = int_to_ptr.hbm [resolvable:$true] %s263
          %s265 = sshll.u32 %s257, 4
          %s266 = int_to_ptr.vmem [resolvable:$true] %s265
          %268 = dma.hbm_to_vmem [thread:$0]  %s264, 128, %s266, %s254
        $region40: #{tpu_custom_call.1} parent=35 // pred_fallthru
          _
        // Predicated region
        $region41: #{tpu_custom_call.1} parent=35 // pred_check
          %p269 = pneg %p68
        $region42: #{tpu_custom_call.1} parent=35 // pred_check_branch
          %271 = sbr.rel (%p269) target = $region44
        $region43: #{tpu_custom_call.1} parent=35 // pred_region
          %s272 = sand.u32 %s22, 1
          %s273 = scalar_lea.sflag [#allocation6], %s272
          %s274 = sand.u32 %s58, 1
          %s275 = smul.addr %s274, 8
          %s276 = scalar_lea.vmem [#allocation5], %s275
          %278 = vsyncadd %s273, 0
          %s279 = smul.addr %s22, 8
          %s280 = scalar_lea.hbm %s1, %s279
          %s282 = sshll.u32 %s280, 4
          %s283 = int_to_ptr.hbm [resolvable:$true] %s282
          %s284 = sshll.u32 %s276, 4
          %s285 = int_to_ptr.vmem [resolvable:$true] %s284
          %287 = dma.hbm_to_vmem [thread:$0]  %s283, 128, %s285, %s273
        $region44: #{tpu_custom_call.1} parent=35 // pred_fallthru
          _
      $region36: #{tpu_custom_call.1} parent=5 // pred_fallthru
        _
      %p288 = scmp.le.s32.totalorder 1, %s22
      %p289 = scmp.lt.s32.totalorder %s22, 3
      %p290 = pnand %p288, %p289
      %p291 = pneg %p290
      // Predicated region
      $region45: #{tpu_custom_call.1} parent=5 // pred_check
        _
      $region46: #{tpu_custom_call.1} parent=5 // pred_check_branch
        %293 = sbr.rel (%p290) target = $region48
      $region47: #{tpu_custom_call.1} parent=5 // pred_region
        %s294 = ssub.s32 %s22, 1
        %s295 = sand.u32 %s35, 1
        %s296 = scalar_lea.sflag [#allocation3], %s295
        %s297 = sand.u32 %s35, 1
        %s298 = smul.addr %s297, 8
        %s299 = scalar_lea.vmem [#allocation2], %s298
        // Predicated region
        $region49: #{tpu_custom_call.1} parent=47 // pred_check
          %p300 = pneg %p48
        $region50: #{tpu_custom_call.1} parent=47 // pred_check_branch
          %302 = sbr.rel (%p300) target = $region52
        $region51: #{tpu_custom_call.1} parent=47 // pred_region
          %304 = dma.done %s296, 128
        $region52: #{tpu_custom_call.1} parent=47 // pred_fallthru
          _
        %s305 = sand.u32 %s27, 1
        %s306 = scalar_lea.sflag [#allocation6], %s305
        %s307 = sand.u32 %s61, 1
        %s308 = smul.addr %s307, 8
        %s309 = scalar_lea.vmem [#allocation5], %s308
        // Predicated region
        $region53: #{tpu_custom_call.1} parent=47 // pred_check
          %p310 = pneg %p74
        $region54: #{tpu_custom_call.1} parent=47 // pred_check_branch
          %312 = sbr.rel (%p310) target = $region56
        $region55: #{tpu_custom_call.1} parent=47 // pred_region
          %314 = dma.done %s306, 128
        $region56: #{tpu_custom_call.1} parent=47 // pred_fallthru
          _
        // Predicated region
        $region57: #{tpu_custom_call.1} parent=47 // pred_check
          %p315 = pneg %p179
        $region58: #{tpu_custom_call.1} parent=47 // pred_check_branch
          %317 = sbr.rel (%p315) target = $region60
        $region59: #{tpu_custom_call.1} parent=47 // pred_region
          %319 = dma.done [#allocation6], 256
        $region60: #{tpu_custom_call.1} parent=47 // pred_fallthru
          _
        %s320 = sand.u32 %s35, 1
        %s321 = scalar_lea.sflag [#allocation3], %s320
        %s322 = sand.u32 %s35, 1
        %s323 = smul.addr %s322, 8
        %s324 = scalar_lea.vmem [#allocation2], %s323
        %p325 = pneg %p48
        %p326 = pneg %p45
        %s327 = sand.u32 %s27, 1
        %s328 = scalar_lea.sflag [#allocation6], %s327
        %s329 = sand.u32 %s61, 1
        %s330 = smul.addr %s329, 8
        %s331 = scalar_lea.vmem [#allocation5], %s330
        %p332 = pneg %p74
        %p333 = pneg %p71
        %p334 = pneg %p95
        %p335 = pneg %p92
        %p336 = pneg %p116
        %p337 = pneg %p113
        %p338 = pneg %p137
        %p339 = pneg %p134
        %p340 = pneg %p158
        %p341 = pneg %p155
        %p342 = pneg %p179
        %p343 = pneg %p176
        %p344 = pneg %p205
        %p345 = pneg %p202
        %s346 = sand.u32 %s192, 1
        %s347 = scalar_lea.sflag [#allocation4], %s346
        %s348 = sand.u32 %s192, 1
        %s349 = smul.addr %s348, 8
        %s350 = scalar_lea.vmem [#allocation8], %s349
        %v352 = vld [vmem:[%s299] sm:$0xff]
        %v353 = vld [vmem:[%s309] sm:$0xff]
        %v354 = vld [vmem:[%s2] sm:$0xf]
        %v355 = vld [vmem:[%s2 + $0x4] sm:$0xf]
        %v356 = vld [vmem:[%s2 + $0x8] sm:$0xf]
        %v357 = vld [vmem:[%s2 + $0xc] sm:$0xf]
        %v358 = vld [vmem:[%s3] sm:$0xf]
        %v359 = vld [vmem:[%s3 + $0x4] sm:$0xf]
        %v360 = vld [vmem:[%s3 + $0x8] sm:$0xf]
        %v361 = vld [vmem:[%s3 + $0xc] sm:$0xf]
        %v362 = vld [vmem:[%s4] sm:$0xf]
        %v363 = vld [vmem:[%s4 + $0x4] sm:$0xf]
        %v364 = vld [vmem:[%s4 + $0x8] sm:$0xf]
        %v365 = vld [vmem:[%s4 + $0xc] sm:$0xf]
        %v366 = vld [vmem:[%s5] sm:$0xf]
        %v367 = vld [vmem:[%s5 + $0x4] sm:$0xf]
        %v368 = vld [vmem:[%s5 + $0x8] sm:$0xf]
        %v369 = vld [vmem:[%s5 + $0xc] sm:$0xf]
        %v370 = vld [vmem:[%s5 + $0x10] sm:$0xf]
        %v371 = vld [vmem:[%s5 + $0x14] sm:$0xf]
        %v372 = vld [vmem:[%s5 + $0x18] sm:$0xf]
        %v373 = vld [vmem:[%s5 + $0x1c] sm:$0xf]
        %v374 = vld [vmem:[#allocation7] sm:$0xff]
        %v375 = vadd.f32 %v352, %v353
        %v376 = vpack.c.bf16 %v375, %v375
        %v377 = vperm.slane %v374, 0
        %v382 = vunpack.c.l.b16 %v354
        %v383 = vunpack.c.l.b16 %v355
        %v384 = vunpack.c.l.b16 %v356
        %v385 = vunpack.c.l.b16 %v357
        %v386 = vpack.c.b16 %v383, %v382
        %v387 = vpack.c.b16 %v385, %v384
        %vm390 = vcmask 261120
        %v392 = vsel %vm390, %v376, 0
        %394 = vmatpush.bf16.msra.mxu0 0
        %395 = vmatpush.bf16.msra.mxu0 0
        %396 = vmatpush.bf16.msra.mxu0 0
        %397 = vmatpush.bf16.msra.mxu0 0
        %398 = vmatpush.bf16.msra.mxu0 0
        %399 = vmatpush.bf16.msra.mxu0 0
        %400 = vmatpush.bf16.msra.mxu0 %v387
        %401 = vmatpush.bf16.msra.mxu0 %v386
        %402 = vmatmul.bf16.gmra.mxu0 %v392
        %v403 = vpop.f32.mrf.mxu0
        %v404 = vadd.f32 %v377, %v403
        %v405 = vpop.f32.mrf.mxu0
        %406 = vdwg.mxu0
        %v407 = vpack.c.bf16 %v352, %v352
        %408 = vrot.lane.b32.xlu0 %v386, 64
        %v409 = vpop.permute.xlu0 %408
        %410 = vrot.lane.b32.xlu0 %v387, 64
        %v411 = vpop.permute.xlu0 %410
        %415 = vrot.lane.b32.xlu0 %v377, 64
        %v416 = vpop.permute.xlu0 %415
        %v419 = vsel %vm390, %v407, 0
        %421 = vmatpush.bf16.msra.mxu0 0
        %422 = vmatpush.bf16.msra.mxu0 0
        %423 = vmatpush.bf16.msra.mxu0 0
        %424 = vmatpush.bf16.msra.mxu0 0
        %425 = vmatpush.bf16.msra.mxu0 0
        %426 = vmatpush.bf16.msra.mxu0 0
        %427 = vmatpush.bf16.msra.mxu0 %v411
        %428 = vmatpush.bf16.msra.mxu0 %v409
        %429 = vmatmul.bf16.gmra.mxu0 %v419
        %v430 = vpop.f32.mrf.mxu0
        %v431 = vadd.f32 %v416, %v430
        %v432 = vpop.f32.mrf.mxu0
        %433 = vdwg.mxu0
        %v434 = vmul.f32 %v404, 0.35355338
        %v435 = vpack.c.bf16 %v434, %v434
        %437 = vrot.lane.b32.xlu0 %v435, 120
        %v438 = vpop.permute.xlu0 %437
        %439 = vrot.lane.b32.xlu0 %v435, 112
        %v440 = vpop.permute.xlu0 %439
        %441 = vrot.lane.b32.xlu0 %v435, 104
        %v442 = vpop.permute.xlu0 %441
        %v443 = vpack.c.bf16 %v404, %v404
        %445 = vrot.lane.b32.xlu0 %v443, 120
        %v446 = vpop.permute.xlu0 %445
        %447 = vrot.lane.b32.xlu0 %v443, 112
        %v448 = vpop.permute.xlu0 %447
        %449 = vrot.lane.b32.xlu0 %v443, 104
        %v450 = vpop.permute.xlu0 %449
        %v451 = vpack.c.bf16 %v431, %v431
        %453 = vrot.lane.b32.xlu0 %v451, 120
        %v454 = vpop.permute.xlu0 %453
        %456 = vrot.lane.b32.xlu0 %v451, 112
        %v457 = vpop.permute.xlu0 %456
        %459 = vrot.lane.b32.xlu0 %v451, 104
        %v460 = vpop.permute.xlu0 %459
        %v462 = vunpack.c.l.b16 %v443
        %v463 = vunpack.c.l.b16 %v446
        %v464 = vunpack.c.l.b16 %v448
        %v465 = vunpack.c.l.b16 %v450
        %v466 = vpack.c.b16 %v462, %v462
        %v467 = vpack.c.b16 %v463, %v463
        %v468 = vpack.c.b16 %v464, %v464
        %v469 = vpack.c.b16 %v465, %v465
        %470 = vrot.lane.b32.xlu0 %v466, 96
        %v471 = vpop.permute.xlu0 %470
        %472 = vrot.lane.b32.xlu0 %v467, 96
        %v473 = vpop.permute.xlu0 %472
        %474 = vrot.lane.b32.xlu0 %v468, 96
        %v475 = vpop.permute.xlu0 %474
        %476 = vrot.lane.b32.xlu0 %v469, 96
        %v477 = vpop.permute.xlu0 %476
        %482 = vxpose.xlu0.c.b16.start [1/8] %v471, 128
        %483 = vxpose.xlu0.c.b16.cont [2/8] 0, 128
        %484 = vxpose.xlu0.c.b16.cont [3/8] 0, 128
        %485 = vxpose.xlu0.c.b16.cont [4/8] 0, 128
        %486 = vxpose.xlu0.c.b16.cont [5/8] 0, 128
        %487 = vxpose.xlu0.c.b16.cont [6/8] 0, 128
        %488 = vxpose.xlu0.c.b16.cont [7/8] 0, 128
        %489 = vxpose.xlu0.c.b16.end [8/8] 0, 128
        %v490 = vpop.trf.xlu0
        %v491 = vpop.trf.xlu0
        %v492 = vpop.trf.xlu0
        %v493 = vpop.trf.xlu0
        %v494 = vpop.trf.xlu0
        %v495 = vpop.trf.xlu0
        %v496 = vpop.trf.xlu0
        %v497 = vpop.trf.xlu0
        %498 = vxpose.xlu0.c.b16.start [1/8] %v473, 128
        %499 = vxpose.xlu0.c.b16.cont [2/8] 0, 128
        %500 = vxpose.xlu0.c.b16.cont [3/8] 0, 128
        %501 = vxpose.xlu0.c.b16.cont [4/8] 0, 128
        %502 = vxpose.xlu0.c.b16.cont [5/8] 0, 128
        %503 = vxpose.xlu0.c.b16.cont [6/8] 0, 128
        %504 = vxpose.xlu0.c.b16.cont [7/8] 0, 128
        %505 = vxpose.xlu0.c.b16.end [8/8] 0, 128
        %v506 = vpop.trf.xlu0
        %v507 = vpop.trf.xlu0
        %v508 = vpop.trf.xlu0
        %v509 = vpop.trf.xlu0
        %v510 = vpop.trf.xlu0
        %v511 = vpop.trf.xlu0
        %v512 = vpop.trf.xlu0
        %v513 = vpop.trf.xlu0
        %514 = vxpose.xlu0.c.b16.start [1/8] %v475, 128
        %515 = vxpose.xlu0.c.b16.cont [2/8] 0, 128
        %516 = vxpose.xlu0.c.b16.cont [3/8] 0, 128
        %517 = vxpose.xlu0.c.b16.cont [4/8] 0, 128
        %518 = vxpose.xlu0.c.b16.cont [5/8] 0, 128
        %519 = vxpose.xlu0.c.b16.cont [6/8] 0, 128
        %520 = vxpose.xlu0.c.b16.cont [7/8] 0, 128
        %521 = vxpose.xlu0.c.b16.end [8/8] 0, 128
        %v522 = vpop.trf.xlu0
        %v523 = vpop.trf.xlu0
        %v524 = vpop.trf.xlu0
        %v525 = vpop.trf.xlu0
        %v526 = vpop.trf.xlu0
        %v527 = vpop.trf.xlu0
        %v528 = vpop.trf.xlu0
        %v529 = vpop.trf.xlu0
        %530 = vxpose.xlu0.c.b16.start [1/8] %v477, 128
        %531 = vxpose.xlu0.c.b16.cont [2/8] 0, 128
        %532 = vxpose.xlu0.c.b16.cont [3/8] 0, 128
        %533 = vxpose.xlu0.c.b16.cont [4/8] 0, 128
        %534 = vxpose.xlu0.c.b16.cont [5/8] 0, 128
        %535 = vxpose.xlu0.c.b16.cont [6/8] 0, 128
        %536 = vxpose.xlu0.c.b16.cont [7/8] 0, 128
        %537 = vxpose.xlu0.c.b16.end [8/8] 0, 128
        %v538 = vpop.trf.xlu0
        %v539 = vpop.trf.xlu0
        %v540 = vpop.trf.xlu0
        %v541 = vpop.trf.xlu0
        %v542 = vpop.trf.xlu0
        %v543 = vpop.trf.xlu0
        %v544 = vpop.trf.xlu0
        %v545 = vpop.trf.xlu0
        %vm546 = vcmask 64512
        %v548 = vsel %vm546, %v435, 0
        %vm550 = vcmask 1043456
        %v552 = vsel %vm550, %v490, 0
        %554 = vmatpush.bf16.msra.mxu0 0
        %555 = vmatpush.bf16.msra.mxu0 0
        %556 = vmatpush.bf16.msra.mxu0 0
        %557 = vmatpush.bf16.msra.mxu0 0
        %558 = vmatpush.bf16.msra.mxu0 0
        %559 = vmatpush.bf16.msra.mxu0 0
        %560 = vmatpush.bf16.msra.mxu0 0
        %561 = vmatpush.bf16.msra.mxu0 %v552
        %562 = vmatmul.bf16.gmra.mxu0 %v548
        %v563 = vpop.f32.mrf.mxu0
        %v564 = vadd.f32 0.0, %v563
        %v565 = vpop.f32.mrf.mxu0
        %566 = vdwg.mxu0
        %v568 = vsel %vm546, %v438, 0
        %v571 = vsel %vm550, %v506, 0
        %573 = vmatpush.bf16.msra.mxu0 0
        %574 = vmatpush.bf16.msra.mxu0 0
        %575 = vmatpush.bf16.msra.mxu0 0
        %576 = vmatpush.bf16.msra.mxu0 0
        %577 = vmatpush.bf16.msra.mxu0 0
        %578 = vmatpush.bf16.msra.mxu0 0
        %579 = vmatpush.bf16.msra.mxu0 0
        %580 = vmatpush.bf16.msra.mxu0 %v571
        %581 = vmatmul.bf16.gmra.mxu0 %v568
        %v582 = vpop.f32.mrf.mxu0
        %v583 = vadd.f32 0.0, %v582
        %v584 = vpop.f32.mrf.mxu0
        %585 = vdwg.mxu0
        %v587 = vsel %vm546, %v440, 0
        %v590 = vsel %vm550, %v522, 0
        %592 = vmatpush.bf16.msra.mxu0 0
        %593 = vmatpush.bf16.msra.mxu0 0
        %594 = vmatpush.bf16.msra.mxu0 0
        %595 = vmatpush.bf16.msra.mxu0 0
        %596 = vmatpush.bf16.msra.mxu0 0
        %597 = vmatpush.bf16.msra.mxu0 0
        %598 = vmatpush.bf16.msra.mxu0 0
        %599 = vmatpush.bf16.msra.mxu0 %v590
        %600 = vmatmul.bf16.gmra.mxu0 %v587
        %v601 = vpop.f32.mrf.mxu0
        %v602 = vadd.f32 0.0, %v601
        %v603 = vpop.f32.mrf.mxu0
        %604 = vdwg.mxu0
        %v606 = vsel %vm546, %v442, 0
        %v609 = vsel %vm550, %v538, 0
        %611 = vmatpush.bf16.msra.mxu0 0
        %612 = vmatpush.bf16.msra.mxu0 0
        %613 = vmatpush.bf16.msra.mxu0 0
        %614 = vmatpush.bf16.msra.mxu0 0
        %615 = vmatpush.bf16.msra.mxu0 0
        %616 = vmatpush.bf16.msra.mxu0 0
        %617 = vmatpush.bf16.msra.mxu0 0
        %618 = vmatpush.bf16.msra.mxu0 %v609
        %619 = vmatmul.bf16.gmra.mxu0 %v606
        %v620 = vpop.f32.mrf.mxu0
        %v621 = vadd.f32 0.0, %v620
        %v622 = vpop.f32.mrf.mxu0
        %623 = vdwg.mxu0
        %v624 = vsel %vm546, %v564, -inf
        %625 = vmax.xlane.f32.xlu0 %v624
        %v626 = vpop.xlane.xlu0 %625
        %v627 = vsel %vm546, %v583, -inf
        %628 = vmax.xlane.f32.xlu0 %v627
        %v629 = vpop.xlane.xlu0 %628
        %v630 = vsel %vm546, %v602, -inf
        %631 = vmax.xlane.f32.xlu0 %v630
        %v632 = vpop.xlane.xlu0 %631
        %v633 = vsel %vm546, %v621, -inf
        %634 = vmax.xlane.f32.xlu0 %v633
        %v635 = vpop.xlane.xlu0 %634
        %v636 = vsub.f32 %v564, %v626
        %v637 = vsub.f32 %v583, %v629
        %v638 = vsub.f32 %v602, %v632
        %v639 = vsub.f32 %v621, %v635
        %v640 = vmul.f32 %v636, 1.442695
        %v641 = vpow.pop %v640
        %v642 = vmul.f32 %v637, 1.442695
        %v643 = vpow.pop %v642
        %v644 = vmul.f32 %v638, 1.442695
        %v645 = vpow.pop %v644
        %v646 = vmul.f32 %v639, 1.442695
        %v647 = vpow.pop %v646
        %v648 = vsel %vm546, %v641, 0.0
        %649 = vadd.xlane.f32.xlu0 %v648
        %v650 = vpop.xlane.xlu0 %649
        %v651 = vsel %vm546, %v643, 0.0
        %652 = vadd.xlane.f32.xlu0 %v651
        %v653 = vpop.xlane.xlu0 %652
        %v654 = vsel %vm546, %v645, 0.0
        %655 = vadd.xlane.f32.xlu0 %v654
        %v656 = vpop.xlane.xlu0 %655
        %v657 = vsel %vm546, %v647, 0.0
        %658 = vadd.xlane.f32.xlu0 %v657
        %v659 = vpop.xlane.xlu0 %658
        %v660 = vrcp.pop %v650
        %v661 = vrcp.pop %v653
        %v662 = vrcp.pop %v656
        %v663 = vrcp.pop %v659
        %v664 = vmul.f32 %v641, %v660
        %v665 = vmul.f32 %v643, %v661
        %v666 = vmul.f32 %v645, %v662
        %v667 = vmul.f32 %v647, %v663
        %v668 = vpack.c.bf16 %v664, %v664
        %v669 = vpack.c.bf16 %v665, %v665
        %v670 = vpack.c.bf16 %v666, %v666
        %v671 = vpack.c.bf16 %v667, %v667
        %672 = vxpose.xlu0.c.b16.start [1/8] %v451, 128
        %673 = vxpose.xlu0.c.b16.cont [2/8] 0, 128
        %674 = vxpose.xlu0.c.b16.cont [3/8] 0, 128
        %675 = vxpose.xlu0.c.b16.cont [4/8] 0, 128
        %676 = vxpose.xlu0.c.b16.cont [5/8] 0, 128
        %677 = vxpose.xlu0.c.b16.cont [6/8] 0, 128
        %678 = vxpose.xlu0.c.b16.cont [7/8] 0, 128
        %679 = vxpose.xlu0.c.b16.end [8/8] 0, 128
        %v680 = vpop.trf.xlu0
        %v681 = vpop.trf.xlu0
        %v682 = vpop.trf.xlu0
        %v683 = vpop.trf.xlu0
        %v684 = vpop.trf.xlu0
        %v685 = vpop.trf.xlu0
        %v686 = vpop.trf.xlu0
        %v687 = vpop.trf.xlu0
        %688 = vxpose.xlu0.c.b16.start [1/8] %v454, 128
        %689 = vxpose.xlu0.c.b16.cont [2/8] 0, 128
        %690 = vxpose.xlu0.c.b16.cont [3/8] 0, 128
        %691 = vxpose.xlu0.c.b16.cont [4/8] 0, 128
        %692 = vxpose.xlu0.c.b16.cont [5/8] 0, 128
        %693 = vxpose.xlu0.c.b16.cont [6/8] 0, 128
        %694 = vxpose.xlu0.c.b16.cont [7/8] 0, 128
        %695 = vxpose.xlu0.c.b16.end [8/8] 0, 128
        %v696 = vpop.trf.xlu0
        %v697 = vpop.trf.xlu0
        %v698 = vpop.trf.xlu0
        %v699 = vpop.trf.xlu0
        %v700 = vpop.trf.xlu0
        %v701 = vpop.trf.xlu0
        %v702 = vpop.trf.xlu0
        %v703 = vpop.trf.xlu0
        %704 = vxpose.xlu0.c.b16.start [1/8] %v457, 128
        %705 = vxpose.xlu0.c.b16.cont [2/8] 0, 128
        %706 = vxpose.xlu0.c.b16.cont [3/8] 0, 128
        %707 = vxpose.xlu0.c.b16.cont [4/8] 0, 128
        %708 = vxpose.xlu0.c.b16.cont [5/8] 0, 128
        %709 = vxpose.xlu0.c.b16.cont [6/8] 0, 128
        %710 = vxpose.xlu0.c.b16.cont [7/8] 0, 128
        %711 = vxpose.xlu0.c.b16.end [8/8] 0, 128
        %v712 = vpop.trf.xlu0
        %v713 = vpop.trf.xlu0
        %v714 = vpop.trf.xlu0
        %v715 = vpop.trf.xlu0
        %v716 = vpop.trf.xlu0
        %v717 = vpop.trf.xlu0
        %v718 = vpop.trf.xlu0
        %v719 = vpop.trf.xlu0
        %720 = vxpose.xlu0.c.b16.start [1/8] %v460, 128
        %721 = vxpose.xlu0.c.b16.cont [2/8] 0, 128
        %722 = vxpose.xlu0.c.b16.cont [3/8] 0, 128
        %723 = vxpose.xlu0.c.b16.cont [4/8] 0, 128
        %724 = vxpose.xlu0.c.b16.cont [5/8] 0, 128
        %725 = vxpose.xlu0.c.b16.cont [6/8] 0, 128
        %726 = vxpose.xlu0.c.b16.cont [7/8] 0, 128
        %727 = vxpose.xlu0.c.b16.end [8/8] 0, 128
        %v728 = vpop.trf.xlu0
        %v729 = vpop.trf.xlu0
        %v730 = vpop.trf.xlu0
        %v731 = vpop.trf.xlu0
        %v732 = vpop.trf.xlu0
        %v733 = vpop.trf.xlu0
        %v734 = vpop.trf.xlu0
        %v735 = vpop.trf.xlu0
        %v737 = vsel %vm546, %v680, 0
        %v740 = vsel %vm546, %v668, 0
        %742 = vmatpush.bf16.xpose.msra.mxu0 0
        %743 = vmatpush.bf16.xpose.msra.mxu0 0
        %744 = vmatpush.bf16.xpose.msra.mxu0 0
        %745 = vmatpush.bf16.xpose.msra.mxu0 0
        %746 = vmatpush.bf16.xpose.msra.mxu0 0
        %747 = vmatpush.bf16.xpose.msra.mxu0 0
        %748 = vmatpush.bf16.xpose.msra.mxu0 0
        %749 = vmatpush.bf16.xpose.msra.mxu0 %v740
        %750 = vmatmul.bf16.gmra.mxu0 %v737
        %v751 = vpop.f32.mrf.mxu0
        %v752 = vadd.f32 0.0, %v751
        %v753 = vpop.f32.mrf.mxu0
        %754 = vdwg.mxu0
        %v756 = vsel %vm546, %v696, 0
        %v759 = vsel %vm546, %v669, 0
        %761 = vmatpush.bf16.xpose.msra.mxu0 0
        %762 = vmatpush.bf16.xpose.msra.mxu0 0
        %763 = vmatpush.bf16.xpose.msra.mxu0 0
        %764 = vmatpush.bf16.xpose.msra.mxu0 0
        %765 = vmatpush.bf16.xpose.msra.mxu0 0
        %766 = vmatpush.bf16.xpose.msra.mxu0 0
        %767 = vmatpush.bf16.xpose.msra.mxu0 0
        %768 = vmatpush.bf16.xpose.msra.mxu0 %v759
        %769 = vmatmul.bf16.gmra.mxu0 %v756
        %v770 = vpop.f32.mrf.mxu0
        %v771 = vadd.f32 0.0, %v770
        %v772 = vpop.f32.mrf.mxu0
        %773 = vdwg.mxu0
        %v775 = vsel %vm546, %v712, 0
        %v778 = vsel %vm546, %v670, 0
        %780 = vmatpush.bf16.xpose.msra.mxu0 0
        %781 = vmatpush.bf16.xpose.msra.mxu0 0
        %782 = vmatpush.bf16.xpose.msra.mxu0 0
        %783 = vmatpush.bf16.xpose.msra.mxu0 0
        %784 = vmatpush.bf16.xpose.msra.mxu0 0
        %785 = vmatpush.bf16.xpose.msra.mxu0 0
        %786 = vmatpush.bf16.xpose.msra.mxu0 0
        %787 = vmatpush.bf16.xpose.msra.mxu0 %v778
        %788 = vmatmul.bf16.gmra.mxu0 %v775
        %v789 = vpop.f32.mrf.mxu0
        %v790 = vadd.f32 0.0, %v789
        %v791 = vpop.f32.mrf.mxu0
        %792 = vdwg.mxu0
        %v794 = vsel %vm546, %v728, 0
        %v797 = vsel %vm546, %v671, 0
        %799 = vmatpush.bf16.xpose.msra.mxu0 0
        %800 = vmatpush.bf16.xpose.msra.mxu0 0
        %801 = vmatpush.bf16.xpose.msra.mxu0 0
        %802 = vmatpush.bf16.xpose.msra.mxu0 0
        %803 = vmatpush.bf16.xpose.msra.mxu0 0
        %804 = vmatpush.bf16.xpose.msra.mxu0 0
        %805 = vmatpush.bf16.xpose.msra.mxu0 0
        %806 = vmatpush.bf16.xpose.msra.mxu0 %v797
        %807 = vmatmul.bf16.gmra.mxu0 %v794
        %v808 = vpop.f32.mrf.mxu0
        %v809 = vadd.f32 0.0, %v808
        %v810 = vpop.f32.mrf.mxu0
        %811 = vdwg.mxu0
        %812 = vxpose.xlu0.b32.start [1/16] %v752, 128
        %813 = vxpose.xlu0.b32.cont [2/16] 0.0, 128
        %814 = vxpose.xlu0.b32.cont [3/16] 0.0, 128
        %815 = vxpose.xlu0.b32.cont [4/16] 0.0, 128
        %816 = vxpose.xlu0.b32.cont [5/16] 0.0, 128
        %817 = vxpose.xlu0.b32.cont [6/16] 0.0, 128
        %818 = vxpose.xlu0.b32.cont [7/16] 0.0, 128
        %819 = vxpose.xlu0.b32.cont [8/16] 0.0, 128
        %820 = vxpose.xlu0.b32.cont [9/16] 0.0, 128
        %821 = vxpose.xlu0.b32.cont [10/16] 0.0, 128
        %822 = vxpose.xlu0.b32.cont [11/16] 0.0, 128
        %823 = vxpose.xlu0.b32.cont [12/16] 0.0, 128
        %824 = vxpose.xlu0.b32.cont [13/16] 0.0, 128
        %825 = vxpose.xlu0.b32.cont [14/16] 0.0, 128
        %826 = vxpose.xlu0.b32.cont [15/16] 0.0, 128
        %827 = vxpose.xlu0.b32.end [16/16] 0.0, 128
        %v828 = vpop.trf.xlu0
        %v829 = vpop.trf.xlu0
        %v830 = vpop.trf.xlu0
        %v831 = vpop.trf.xlu0
        %v832 = vpop.trf.xlu0
        %v833 = vpop.trf.xlu0
        %v834 = vpop.trf.xlu0
        %v835 = vpop.trf.xlu0
        %v836 = vpop.trf.xlu0
        %v837 = vpop.trf.xlu0
        %v838 = vpop.trf.xlu0
        %v839 = vpop.trf.xlu0
        %v840 = vpop.trf.xlu0
        %v841 = vpop.trf.xlu0
        %v842 = vpop.trf.xlu0
        %v843 = vpop.trf.xlu0
        %844 = vxpose.xlu0.b32.start [1/16] %v771, 128
        %845 = vxpose.xlu0.b32.cont [2/16] 0.0, 128
        %846 = vxpose.xlu0.b32.cont [3/16] 0.0, 128
        %847 = vxpose.xlu0.b32.cont [4/16] 0.0, 128
        %848 = vxpose.xlu0.b32.cont [5/16] 0.0, 128
        %849 = vxpose.xlu0.b32.cont [6/16] 0.0, 128
        %850 = vxpose.xlu0.b32.cont [7/16] 0.0, 128
        %851 = vxpose.xlu0.b32.cont [8/16] 0.0, 128
        %852 = vxpose.xlu0.b32.cont [9/16] 0.0, 128
        %853 = vxpose.xlu0.b32.cont [10/16] 0.0, 128
        %854 = vxpose.xlu0.b32.cont [11/16] 0.0, 128
        %855 = vxpose.xlu0.b32.cont [12/16] 0.0, 128
        %856 = vxpose.xlu0.b32.cont [13/16] 0.0, 128
        %857 = vxpose.xlu0.b32.cont [14/16] 0.0, 128
        %858 = vxpose.xlu0.b32.cont [15/16] 0.0, 128
        %859 = vxpose.xlu0.b32.end [16/16] 0.0, 128
        %v860 = vpop.trf.xlu0
        %v861 = vpop.trf.xlu0
        %v862 = vpop.trf.xlu0
        %v863 = vpop.trf.xlu0
        %v864 = vpop.trf.xlu0
        %v865 = vpop.trf.xlu0
        %v866 = vpop.trf.xlu0
        %v867 = vpop.trf.xlu0
        %v868 = vpop.trf.xlu0
        %v869 = vpop.trf.xlu0
        %v870 = vpop.trf.xlu0
        %v871 = vpop.trf.xlu0
        %v872 = vpop.trf.xlu0
        %v873 = vpop.trf.xlu0
        %v874 = vpop.trf.xlu0
        %v875 = vpop.trf.xlu0
        %876 = vxpose.xlu0.b32.start [1/16] %v790, 128
        %877 = vxpose.xlu0.b32.cont [2/16] 0.0, 128
        %878 = vxpose.xlu0.b32.cont [3/16] 0.0, 128
        %879 = vxpose.xlu0.b32.cont [4/16] 0.0, 128
        %880 = vxpose.xlu0.b32.cont [5/16] 0.0, 128
        %881 = vxpose.xlu0.b32.cont [6/16] 0.0, 128
        %882 = vxpose.xlu0.b32.cont [7/16] 0.0, 128
        %883 = vxpose.xlu0.b32.cont [8/16] 0.0, 128
        %884 = vxpose.xlu0.b32.cont [9/16] 0.0, 128
        %885 = vxpose.xlu0.b32.cont [10/16] 0.0, 128
        %886 = vxpose.xlu0.b32.cont [11/16] 0.0, 128
        %887 = vxpose.xlu0.b32.cont [12/16] 0.0, 128
        %888 = vxpose.xlu0.b32.cont [13/16] 0.0, 128
        %889 = vxpose.xlu0.b32.cont [14/16] 0.0, 128
        %890 = vxpose.xlu0.b32.cont [15/16] 0.0, 128
        %891 = vxpose.xlu0.b32.end [16/16] 0.0, 128
        %v892 = vpop.trf.xlu0
        %v893 = vpop.trf.xlu0
        %v894 = vpop.trf.xlu0
        %v895 = vpop.trf.xlu0
        %v896 = vpop.trf.xlu0
        %v897 = vpop.trf.xlu0
        %v898 = vpop.trf.xlu0
        %v899 = vpop.trf.xlu0
        %v900 = vpop.trf.xlu0
        %v901 = vpop.trf.xlu0
        %v902 = vpop.trf.xlu0
        %v903 = vpop.trf.xlu0
        %v904 = vpop.trf.xlu0
        %v905 = vpop.trf.xlu0
        %v906 = vpop.trf.xlu0
        %v907 = vpop.trf.xlu0
        %908 = vxpose.xlu0.b32.start [1/16] %v809, 128
        %909 = vxpose.xlu0.b32.cont [2/16] 0.0, 128
        %910 = vxpose.xlu0.b32.cont [3/16] 0.0, 128
        %911 = vxpose.xlu0.b32.cont [4/16] 0.0, 128
        %912 = vxpose.xlu0.b32.cont [5/16] 0.0, 128
        %913 = vxpose.xlu0.b32.cont [6/16] 0.0, 128
        %914 = vxpose.xlu0.b32.cont [7/16] 0.0, 128
        %915 = vxpose.xlu0.b32.cont [8/16] 0.0, 128
        %916 = vxpose.xlu0.b32.cont [9/16] 0.0, 128
        %917 = vxpose.xlu0.b32.cont [10/16] 0.0, 128
        %918 = vxpose.xlu0.b32.cont [11/16] 0.0, 128
        %919 = vxpose.xlu0.b32.cont [12/16] 0.0, 128
        %920 = vxpose.xlu0.b32.cont [13/16] 0.0, 128
        %921 = vxpose.xlu0.b32.cont [14/16] 0.0, 128
        %922 = vxpose.xlu0.b32.cont [15/16] 0.0, 128
        %923 = vxpose.xlu0.b32.end [16/16] 0.0, 128
        %v924 = vpop.trf.xlu0
        %v925 = vpop.trf.xlu0
        %v926 = vpop.trf.xlu0
        %v927 = vpop.trf.xlu0
        %v928 = vpop.trf.xlu0
        %v929 = vpop.trf.xlu0
        %v930 = vpop.trf.xlu0
        %v931 = vpop.trf.xlu0
        %v932 = vpop.trf.xlu0
        %v933 = vpop.trf.xlu0
        %v934 = vpop.trf.xlu0
        %v935 = vpop.trf.xlu0
        %v936 = vpop.trf.xlu0
        %v937 = vpop.trf.xlu0
        %v938 = vpop.trf.xlu0
        %v939 = vpop.trf.xlu0
        %v940 = vrot.slane %v892, 4
        %vm941 = vcmask 1047556
        %v942 = vsel %vm941, %v940, %v828
        %v943 = vrot.slane %v828, 4
        %v944 = vsel %vm941, %v892, %v943
        %v946 = vunpack.c.l.s4 1983009808
        %v947 = vunpack.c.0.s8 %v946
        %v948 = vperm.slane %v942, %v947
        %v950 = vunpack.c.l.s4 1983009808
        %v951 = vunpack.c.0.s8 %v950
        %v952 = vperm.slane %v944, %v951
        %v953 = vrot.slane %v924, 4
        %v954 = vsel %vm941, %v953, %v860
        %v955 = vrot.slane %v860, 4
        %v956 = vsel %vm941, %v924, %v955
        %v958 = vunpack.c.l.s4 1983009808
        %v959 = vunpack.c.0.s8 %v958
        %v960 = vperm.slane %v954, %v959
        %v962 = vunpack.c.l.s4 1983009808
        %v963 = vunpack.c.0.s8 %v962
        %v964 = vperm.slane %v956, %v963
        %v965 = vrot.slane %v960, 4
        %v966 = vsel %vm941, %v965, %v948
        %v967 = vrot.slane %v948, 4
        %v968 = vsel %vm941, %v960, %v967
        %v970 = vunpack.c.l.s4 1934713408
        %v971 = vunpack.c.0.s8 %v970
        %v972 = vperm.slane %v966, %v971
        %v974 = vunpack.c.l.s4 1934713408
        %v975 = vunpack.c.0.s8 %v974
        %v976 = vperm.slane %v968, %v975
        %v977 = vrot.slane %v964, 4
        %v978 = vsel %vm941, %v977, %v952
        %v979 = vrot.slane %v952, 4
        %v980 = vsel %vm941, %v964, %v979
        %v982 = vunpack.c.l.s4 1934713408
        %v983 = vunpack.c.0.s8 %v982
        %v984 = vperm.slane %v978, %v983
        %v986 = vunpack.c.l.s4 1934713408
        %v987 = vunpack.c.0.s8 %v986
        %v988 = vperm.slane %v980, %v987
        %v989 = vrot.slane %v972, 4
        %v990 = vsel %vm941, 0.0, %v989
        %v991 = vrot.slane %v976, 4
        %v992 = vsel %vm941, 0.0, %v991
        %v993 = vrot.slane %v984, 4
        %v994 = vsel %vm941, 0.0, %v993
        %v995 = vrot.slane %v988, 4
        %v996 = vsel %vm941, 0.0, %v995
        %v997 = vsel %vm941, %v991, %v972
        %v999 = vunpack.c.l.s4 1983009808
        %v1000 = vunpack.c.0.s8 %v999
        %v1001 = vperm.slane %v997, %v1000
        %v1002 = vrot.slane %v992, 4
        %v1003 = vsel %vm941, %v1002, %v990
        %v1005 = vunpack.c.l.s4 1983009808
        %v1006 = vunpack.c.0.s8 %v1005
        %v1007 = vperm.slane %v1003, %v1006
        %v1008 = vsel %vm941, %v995, %v984
        %v1010 = vunpack.c.l.s4 1983009808
        %v1011 = vunpack.c.0.s8 %v1010
        %v1012 = vperm.slane %v1008, %v1011
        %v1013 = vrot.slane %v996, 4
        %v1014 = vsel %vm941, %v1013, %v994
        %v1016 = vunpack.c.l.s4 1983009808
        %v1017 = vunpack.c.0.s8 %v1016
        %v1018 = vperm.slane %v1014, %v1017
        %v1019 = vrot.slane %v1007, 4
        %v1020 = vsel %vm941, %v1019, %v1001
        %v1021 = vrot.slane %v1001, 4
        %v1022 = vsel %vm941, %v1007, %v1021
        %v1024 = vunpack.c.l.s4 1934713408
        %v1025 = vunpack.c.0.s8 %v1024
        %v1026 = vperm.slane %v1020, %v1025
        %v1028 = vunpack.c.l.s4 1934713408
        %v1029 = vunpack.c.0.s8 %v1028
        %v1030 = vperm.slane %v1022, %v1029
        %v1031 = vrot.slane %v1018, 4
        %v1032 = vsel %vm941, %v1031, %v1012
        %v1033 = vrot.slane %v1012, 4
        %v1034 = vsel %vm941, %v1018, %v1033
        %v1036 = vunpack.c.l.s4 1934713408
        %v1037 = vunpack.c.0.s8 %v1036
        %v1038 = vperm.slane %v1032, %v1037
        %v1040 = vunpack.c.l.s4 1934713408
        %v1041 = vunpack.c.0.s8 %v1040
        %v1042 = vperm.slane %v1034, %v1041
        %v1043 = vrot.slane %v1038, 4
        %v1044 = vsel %vm941, %v1043, %v1026
        %v1045 = vrot.slane %v1026, 4
        %v1046 = vsel %vm941, %v1038, %v1045
        %v1047 = vrot.slane %v1042, 4
        %v1048 = vsel %vm941, %v1047, %v1030
        %v1049 = vrot.slane %v1030, 4
        %v1050 = vsel %vm941, %v1042, %v1049
        %1052 = vrot.lane.b32.xlu0 %v1046, 8
        %v1053 = vpop.permute.xlu0 %1052
        %1056 = vrot.lane.b32.xlu0 %v1048, 16
        %v1057 = vpop.permute.xlu0 %1056
        %1060 = vrot.lane.b32.xlu0 %v1050, 24
        %v1061 = vpop.permute.xlu0 %1060
        %v1063 = vsel %vm546, %v1044, %v1053
        %vm1064 = vcmask 130048
        %v1065 = vsel %vm1064, %v1063, %v1057
        %vm1066 = vcmask 195584
        %v1067 = vsel %vm1066, %v1065, %v1061
        %v1068 = vpack.c.bf16 %v1067, %v1067
        %v1069 = vperm.slane %v374, 1
        %v1074 = vunpack.c.l.b16 %v358
        %v1075 = vunpack.c.l.b16 %v359
        %v1076 = vunpack.c.l.b16 %v360
        %v1077 = vunpack.c.l.b16 %v361
        %v1078 = vpack.c.b16 %v1075, %v1074
        %v1079 = vpack.c.b16 %v1077, %v1076
        %v1083 = vsel %vm390, %v1068, 0
        %1085 = vmatpush.bf16.msra.mxu0 0
        %1086 = vmatpush.bf16.msra.mxu0 0
        %1087 = vmatpush.bf16.msra.mxu0 0
        %1088 = vmatpush.bf16.msra.mxu0 0
        %1089 = vmatpush.bf16.msra.mxu0 0
        %1090 = vmatpush.bf16.msra.mxu0 0
        %1091 = vmatpush.bf16.msra.mxu0 %v1079
        %1092 = vmatpush.bf16.msra.mxu0 %v1078
        %1093 = vmatmul.bf16.gmra.mxu0 %v1083
        %v1094 = vpop.f32.mrf.mxu0
        %v1095 = vadd.f32 %v1069, %v1094
        %v1096 = vpop.f32.mrf.mxu0
        %1097 = vdwg.mxu0
        %v1098 = vadd.f32 %v352, %v1095
        %v1099 = vsel %vm390, %v1098, 0.0
        %1100 = vadd.xlane.f32.xlu0 %v1099
        %v1101 = vpop.xlane.xlu0 %1100
        %v1102 = vrcp.pop 32.0
        %v1103 = vmul.f32 32.0, %v1102
        %v1104 = vsub.f32 1.0, %v1103
        %v1105 = vmul.f32 %v1102, %v1104
        %v1106 = vadd.f32 %v1102, %v1105
        %vm1107 = vweird.f32 %v1102
        %v1108 = vsel %vm1107, %v1102, %v1106
        %v1109 = vmul.f32 %v1101, %v1108
        %v1110 = vsub.f32 %v1098, %v1109
        %v1111 = vmul.f32 %v1110, %v1110
        %v1112 = vsel %vm390, %v1111, 0.0
        %1113 = vadd.xlane.f32.xlu0 %v1112
        %v1114 = vpop.xlane.xlu0 %1113
        %v1115 = vmul.f32 %v1114, %v1108
        %v1116 = vadd.f32 %v1115, 1e-05
        %v1117 = vrsqrt.pop %v1116
        %v1118 = vmul.f32 %v1117, %v1116
        %v1119 = vmul.f32 %v1118, %v1117
        %v1120 = vmul.f32 0.5, %v1119
        %v1121 = vsub.f32 1.5, %v1120
        %v1122 = vmul.f32 %v1117, %v1121
        %vm1123 = vweird.f32 %v1116
        %vm1124 = vweird.f32 %v1117
        %vm1125 = vmor %vm1123, %vm1124
        %v1126 = vsel %vm1125, %v1117, %v1122
        %v1127 = vmul.f32 %v1110, %v1126
        %v1128 = vperm.slane %v374, 4
        %v1129 = vmul.f32 %v1127, %v1128
        %v1130 = vperm.slane %v374, 5
        %v1131 = vadd.f32 %v1129, %v1130
        %v1132 = vpack.c.bf16 %v1131, %v1131
        %v1133 = vperm.slane %v374, 2
        %v1138 = vunpack.c.l.b16 %v362
        %v1139 = vunpack.c.l.b16 %v363
        %v1140 = vunpack.c.l.b16 %v364
        %v1141 = vunpack.c.l.b16 %v365
        %v1142 = vpack.c.b16 %v1139, %v1138
        %v1143 = vpack.c.b16 %v1141, %v1140
        %v1147 = vsel %vm390, %v1132, 0
        %1149 = vmatpush.bf16.msra.mxu0 0
        %1150 = vmatpush.bf16.msra.mxu0 0
        %1151 = vmatpush.bf16.msra.mxu0 0
        %1152 = vmatpush.bf16.msra.mxu0 0
        %1153 = vmatpush.bf16.msra.mxu0 0
        %1154 = vmatpush.bf16.msra.mxu0 0
        %1155 = vmatpush.bf16.msra.mxu0 %v1143
        %1156 = vmatpush.bf16.msra.mxu0 %v1142
        %1157 = vmatmul.bf16.gmra.mxu0 %v1147
        %v1158 = vpop.f32.mrf.mxu0
        %v1159 = vadd.f32 %v1133, %v1158
        %v1160 = vpop.f32.mrf.mxu0
        %1161 = vdwg.mxu0
        %v1162 = vmax.f32 %v1159, 0.0
        %v1163 = vpack.c.bf16 %v1162, %v1162
        %v1164 = vperm.slane %v374, 3
        %v1173 = vunpack.c.l.b16 %v366
        %v1174 = vunpack.c.l.b16 %v367
        %v1175 = vunpack.c.l.b16 %v368
        %v1176 = vunpack.c.l.b16 %v369
        %v1177 = vunpack.c.l.b16 %v370
        %v1178 = vunpack.c.l.b16 %v371
        %v1179 = vunpack.c.l.b16 %v372
        %v1180 = vunpack.c.l.b16 %v373
        %v1181 = vpack.c.b16 %v1174, %v1173
        %v1182 = vpack.c.b16 %v1176, %v1175
        %v1183 = vpack.c.b16 %v1178, %v1177
        %v1184 = vpack.c.b16 %v1180, %v1179
        %vm1189 = vcmask 523264
        %v1191 = vsel %vm1189, %v1163, 0
        %1193 = vmatpush.bf16.msra.mxu0 0
        %1194 = vmatpush.bf16.msra.mxu0 0
        %1195 = vmatpush.bf16.msra.mxu0 0
        %1196 = vmatpush.bf16.msra.mxu0 0
        %1197 = vmatpush.bf16.msra.mxu0 %v1184
        %1198 = vmatpush.bf16.msra.mxu0 %v1183
        %1199 = vmatpush.bf16.msra.mxu0 %v1182
        %1200 = vmatpush.bf16.msra.mxu0 %v1181
        %1201 = vmatmul.bf16.gmra.mxu0 %v1191
        %v1202 = vpop.f32.mrf.mxu0
        %v1203 = vadd.f32 %v1164, %v1202
        %v1204 = vpop.f32.mrf.mxu0
        %1205 = vdwg.mxu0
        %v1206 = vadd.f32 %v1131, %v1203
        %v1207 = vsel %vm390, %v1206, 0.0
        %1208 = vadd.xlane.f32.xlu0 %v1207
        %v1209 = vpop.xlane.xlu0 %1208
        %v1210 = vmul.f32 %v1209, %v1108
        %v1211 = vsub.f32 %v1206, %v1210
        %v1212 = vmul.f32 %v1211, %v1211
        %v1213 = vsel %vm390, %v1212, 0.0
        %1214 = vadd.xlane.f32.xlu0 %v1213
        %v1215 = vpop.xlane.xlu0 %1214
        %v1216 = vmul.f32 %v1215, %v1108
        %v1217 = vadd.f32 %v1216, 1e-05
        %v1218 = vrsqrt.pop %v1217
        %v1219 = vmul.f32 %v1218, %v1217
        %v1220 = vmul.f32 %v1219, %v1218
        %v1221 = vmul.f32 0.5, %v1220
        %v1222 = vsub.f32 1.5, %v1221
        %v1223 = vmul.f32 %v1218, %v1222
        %vm1224 = vweird.f32 %v1217
        %vm1225 = vweird.f32 %v1218
        %vm1226 = vmor %vm1224, %vm1225
        %v1227 = vsel %vm1226, %v1218, %v1223
        %v1228 = vmul.f32 %v1211, %v1227
        %v1229 = vperm.slane %v374, 6
        %v1230 = vmul.f32 %v1228, %v1229
        %v1231 = vperm.slane %v374, 7
        %v1232 = vadd.f32 %v1230, %v1231
        %s1233 = scalar_lea.vmem %s2, 16
        %v1234 = vld [vmem:[%s1233] sm:$0xf]
        %v1235 = vld [vmem:[%s1233 + $0x4] sm:$0xf]
        %v1236 = vld [vmem:[%s1233 + $0x8] sm:$0xf]
        %v1237 = vld [vmem:[%s1233 + $0xc] sm:$0xf]
        %s1238 = scalar_lea.vmem %s3, 16
        %v1239 = vld [vmem:[%s1238] sm:$0xf]
        %v1240 = vld [vmem:[%s1238 + $0x4] sm:$0xf]
        %v1241 = vld [vmem:[%s1238 + $0x8] sm:$0xf]
        %v1242 = vld [vmem:[%s1238 + $0xc] sm:$0xf]
        %s1243 = scalar_lea.vmem %s4, 16
        %v1244 = vld [vmem:[%s1243] sm:$0xf]
        %v1245 = vld [vmem:[%s1243 + $0x4] sm:$0xf]
        %v1246 = vld [vmem:[%s1243 + $0x8] sm:$0xf]
        %v1247 = vld [vmem:[%s1243 + $0xc] sm:$0xf]
        %s1248 = scalar_lea.vmem %s5, 32
        %v1249 = vld [vmem:[%s1248] sm:$0xf]
        %v1250 = vld [vmem:[%s1248 + $0x4] sm:$0xf]
        %v1251 = vld [vmem:[%s1248 + $0x8] sm:$0xf]
        %v1252 = vld [vmem:[%s1248 + $0xc] sm:$0xf]
        %v1253 = vld [vmem:[%s1248 + $0x10] sm:$0xf]
        %v1254 = vld [vmem:[%s1248 + $0x14] sm:$0xf]
        %v1255 = vld [vmem:[%s1248 + $0x18] sm:$0xf]
        %v1256 = vld [vmem:[%s1248 + $0x1c] sm:$0xf]
        %s1257 = scalar_lea.vmem [#allocation7], 8
        %v1258 = vld [vmem:[%s1257] sm:$0xff]
        %v1259 = vadd.f32 %v1232, %v353
        %v1260 = vpack.c.bf16 %v1259, %v1259
        %v1261 = vperm.slane %v1258, 0
        %v1266 = vunpack.c.l.b16 %v1234
        %v1267 = vunpack.c.l.b16 %v1235
        %v1268 = vunpack.c.l.b16 %v1236
        %v1269 = vunpack.c.l.b16 %v1237
        %v1270 = vpack.c.b16 %v1267, %v1266
        %v1271 = vpack.c.b16 %v1269, %v1268
        %v1275 = vsel %vm390, %v1260, 0
        %1277 = vmatpush.bf16.msra.mxu0 0
        %1278 = vmatpush.bf16.msra.mxu0 0
        %1279 = vmatpush.bf16.msra.mxu0 0
        %1280 = vmatpush.bf16.msra.mxu0 0
        %1281 = vmatpush.bf16.msra.mxu0 0
        %1282 = vmatpush.bf16.msra.mxu0 0
        %1283 = vmatpush.bf16.msra.mxu0 %v1271
        %1284 = vmatpush.bf16.msra.mxu0 %v1270
        %1285 = vmatmul.bf16.gmra.mxu0 %v1275
        %v1286 = vpop.f32.mrf.mxu0
        %v1287 = vadd.f32 %v1261, %v1286
        %v1288 = vpop.f32.mrf.mxu0
        %1289 = vdwg.mxu0
        %v1290 = vpack.c.bf16 %v1232, %v1232
        %1291 = vrot.lane.b32.xlu0 %v1270, 64
        %v1292 = vpop.permute.xlu0 %1291
        %1293 = vrot.lane.b32.xlu0 %v1271, 64
        %v1294 = vpop.permute.xlu0 %1293
        %1298 = vrot.lane.b32.xlu0 %v1261, 64
        %v1299 = vpop.permute.xlu0 %1298
        %v1302 = vsel %vm390, %v1290, 0
        %1304 = vmatpush.bf16.msra.mxu0 0
        %1305 = vmatpush.bf16.msra.mxu0 0
        %1306 = vmatpush.bf16.msra.mxu0 0
        %1307 = vmatpush.bf16.msra.mxu0 0
        %1308 = vmatpush.bf16.msra.mxu0 0
        %1309 = vmatpush.bf16.msra.mxu0 0
        %1310 = vmatpush.bf16.msra.mxu0 %v1294
        %1311 = vmatpush.bf16.msra.mxu0 %v1292
        %1312 = vmatmul.bf16.gmra.mxu0 %v1302
        %v1313 = vpop.f32.mrf.mxu0
        %v1314 = vadd.f32 %v1299, %v1313
        %v1315 = vpop.f32.mrf.mxu0
        %1316 = vdwg.mxu0
        %v1317 = vmul.f32 %v1287, 0.35355338
        %v1318 = vpack.c.bf16 %v1317, %v1317
        %1320 = vrot.lane.b32.xlu0 %v1318, 120
        %v1321 = vpop.permute.xlu0 %1320
        %1322 = vrot.lane.b32.xlu0 %v1318, 112
        %v1323 = vpop.permute.xlu0 %1322
        %1324 = vrot.lane.b32.xlu0 %v1318, 104
        %v1325 = vpop.permute.xlu0 %1324
        %v1326 = vpack.c.bf16 %v1287, %v1287
        %1328 = vrot.lane.b32.xlu0 %v1326, 120
        %v1329 = vpop.permute.xlu0 %1328
        %1330 = vrot.lane.b32.xlu0 %v1326, 112
        %v1331 = vpop.permute.xlu0 %1330
        %1332 = vrot.lane.b32.xlu0 %v1326, 104
        %v1333 = vpop.permute.xlu0 %1332
        %v1334 = vpack.c.bf16 %v1314, %v1314
        %1336 = vrot.lane.b32.xlu0 %v1334, 120
        %v1337 = vpop.permute.xlu0 %1336
        %1339 = vrot.lane.b32.xlu0 %v1334, 112
        %v1340 = vpop.permute.xlu0 %1339
        %1342 = vrot.lane.b32.xlu0 %v1334, 104
        %v1343 = vpop.permute.xlu0 %1342
        %v1345 = vunpack.c.l.b16 %v1326
        %v1346 = vunpack.c.l.b16 %v1329
        %v1347 = vunpack.c.l.b16 %v1331
        %v1348 = vunpack.c.l.b16 %v1333
        %v1349 = vpack.c.b16 %v1345, %v1345
        %v1350 = vpack.c.b16 %v1346, %v1346
        %v1351 = vpack.c.b16 %v1347, %v1347
        %v1352 = vpack.c.b16 %v1348, %v1348
        %1353 = vrot.lane.b32.xlu0 %v1349, 96
        %v1354 = vpop.permute.xlu0 %1353
        %1355 = vrot.lane.b32.xlu0 %v1350, 96
        %v1356 = vpop.permute.xlu0 %1355
        %1357 = vrot.lane.b32.xlu0 %v1351, 96
        %v1358 = vpop.permute.xlu0 %1357
        %1359 = vrot.lane.b32.xlu0 %v1352, 96
        %v1360 = vpop.permute.xlu0 %1359
        %1365 = vxpose.xlu0.c.b16.start [1/8] %v1354, 128
        %1366 = vxpose.xlu0.c.b16.cont [2/8] 0, 128
        %1367 = vxpose.xlu0.c.b16.cont [3/8] 0, 128
        %1368 = vxpose.xlu0.c.b16.cont [4/8] 0, 128
        %1369 = vxpose.xlu0.c.b16.cont [5/8] 0, 128
        %1370 = vxpose.xlu0.c.b16.cont [6/8] 0, 128
        %1371 = vxpose.xlu0.c.b16.cont [7/8] 0, 128
        %1372 = vxpose.xlu0.c.b16.end [8/8] 0, 128
        %v1373 = vpop.trf.xlu0
        %v1374 = vpop.trf.xlu0
        %v1375 = vpop.trf.xlu0
        %v1376 = vpop.trf.xlu0
        %v1377 = vpop.trf.xlu0
        %v1378 = vpop.trf.xlu0
        %v1379 = vpop.trf.xlu0
        %v1380 = vpop.trf.xlu0
        %1381 = vxpose.xlu0.c.b16.start [1/8] %v1356, 128
        %1382 = vxpose.xlu0.c.b16.cont [2/8] 0, 128
        %1383 = vxpose.xlu0.c.b16.cont [3/8] 0, 128
        %1384 = vxpose.xlu0.c.b16.cont [4/8] 0, 128
        %1385 = vxpose.xlu0.c.b16.cont [5/8] 0, 128
        %1386 = vxpose.xlu0.c.b16.cont [6/8] 0, 128
        %1387 = vxpose.xlu0.c.b16.cont [7/8] 0, 128
        %1388 = vxpose.xlu0.c.b16.end [8/8] 0, 128
        %v1389 = vpop.trf.xlu0
        %v1390 = vpop.trf.xlu0
        %v1391 = vpop.trf.xlu0
        %v1392 = vpop.trf.xlu0
        %v1393 = vpop.trf.xlu0
        %v1394 = vpop.trf.xlu0
        %v1395 = vpop.trf.xlu0
        %v1396 = vpop.trf.xlu0
        %1397 = vxpose.xlu0.c.b16.start [1/8] %v1358, 128
        %1398 = vxpose.xlu0.c.b16.cont [2/8] 0, 128
        %1399 = vxpose.xlu0.c.b16.cont [3/8] 0, 128
        %1400 = vxpose.xlu0.c.b16.cont [4/8] 0, 128
        %1401 = vxpose.xlu0.c.b16.cont [5/8] 0, 128
        %1402 = vxpose.xlu0.c.b16.cont [6/8] 0, 128
        %1403 = vxpose.xlu0.c.b16.cont [7/8] 0, 128
        %1404 = vxpose.xlu0.c.b16.end [8/8] 0, 128
        %v1405 = vpop.trf.xlu0
        %v1406 = vpop.trf.xlu0
        %v1407 = vpop.trf.xlu0
        %v1408 = vpop.trf.xlu0
        %v1409 = vpop.trf.xlu0
        %v1410 = vpop.trf.xlu0
        %v1411 = vpop.trf.xlu0
        %v1412 = vpop.trf.xlu0
        %1413 = vxpose.xlu0.c.b16.start [1/8] %v1360, 128
        %1414 = vxpose.xlu0.c.b16.cont [2/8] 0, 128
        %1415 = vxpose.xlu0.c.b16.cont [3/8] 0, 128
        %1416 = vxpose.xlu0.c.b16.cont [4/8] 0, 128
        %1417 = vxpose.xlu0.c.b16.cont [5/8] 0, 128
        %1418 = vxpose.xlu0.c.b16.cont [6/8] 0, 128
        %1419 = vxpose.xlu0.c.b16.cont [7/8] 0, 128
        %1420 = vxpose.xlu0.c.b16.end [8/8] 0, 128
        %v1421 = vpop.trf.xlu0
        %v1422 = vpop.trf.xlu0
        %v1423 = vpop.trf.xlu0
        %v1424 = vpop.trf.xlu0
        %v1425 = vpop.trf.xlu0
        %v1426 = vpop.trf.xlu0
        %v1427 = vpop.trf.xlu0
        %v1428 = vpop.trf.xlu0
        %v1430 = vsel %vm546, %v1318, 0
        %v1433 = vsel %vm550, %v1373, 0
        %1435 = vmatpush.bf16.msra.mxu0 0
        %1436 = vmatpush.bf16.msra.mxu0 0
        %1437 = vmatpush.bf16.msra.mxu0 0
        %1438 = vmatpush.bf16.msra.mxu0 0
        %1439 = vmatpush.bf16.msra.mxu0 0
        %1440 = vmatpush.bf16.msra.mxu0 0
        %1441 = vmatpush.bf16.msra.mxu0 0
        %1442 = vmatpush.bf16.msra.mxu0 %v1433
        %1443 = vmatmul.bf16.gmra.mxu0 %v1430
        %v1444 = vpop.f32.mrf.mxu0
        %v1445 = vadd.f32 0.0, %v1444
        %v1446 = vpop.f32.mrf.mxu0
        %1447 = vdwg.mxu0
        %v1449 = vsel %vm546, %v1321, 0
        %v1452 = vsel %vm550, %v1389, 0
        %1454 = vmatpush.bf16.msra.mxu0 0
        %1455 = vmatpush.bf16.msra.mxu0 0
        %1456 = vmatpush.bf16.msra.mxu0 0
        %1457 = vmatpush.bf16.msra.mxu0 0
        %1458 = vmatpush.bf16.msra.mxu0 0
        %1459 = vmatpush.bf16.msra.mxu0 0
        %1460 = vmatpush.bf16.msra.mxu0 0
        %1461 = vmatpush.bf16.msra.mxu0 %v1452
        %1462 = vmatmul.bf16.gmra.mxu0 %v1449
        %v1463 = vpop.f32.mrf.mxu0
        %v1464 = vadd.f32 0.0, %v1463
        %v1465 = vpop.f32.mrf.mxu0
        %1466 = vdwg.mxu0
        %v1468 = vsel %vm546, %v1323, 0
        %v1471 = vsel %vm550, %v1405, 0
        %1473 = vmatpush.bf16.msra.mxu0 0
        %1474 = vmatpush.bf16.msra.mxu0 0
        %1475 = vmatpush.bf16.msra.mxu0 0
        %1476 = vmatpush.bf16.msra.mxu0 0
        %1477 = vmatpush.bf16.msra.mxu0 0
        %1478 = vmatpush.bf16.msra.mxu0 0
        %1479 = vmatpush.bf16.msra.mxu0 0
        %1480 = vmatpush.bf16.msra.mxu0 %v1471
        %1481 = vmatmul.bf16.gmra.mxu0 %v1468
        %v1482 = vpop.f32.mrf.mxu0
        %v1483 = vadd.f32 0.0, %v1482
        %v1484 = vpop.f32.mrf.mxu0
        %1485 = vdwg.mxu0
        %v1487 = vsel %vm546, %v1325, 0
        %v1490 = vsel %vm550, %v1421, 0
        %1492 = vmatpush.bf16.msra.mxu0 0
        %1493 = vmatpush.bf16.msra.mxu0 0
        %1494 = vmatpush.bf16.msra.mxu0 0
        %1495 = vmatpush.bf16.msra.mxu0 0
        %1496 = vmatpush.bf16.msra.mxu0 0
        %1497 = vmatpush.bf16.msra.mxu0 0
        %1498 = vmatpush.bf16.msra.mxu0 0
        %1499 = vmatpush.bf16.msra.mxu0 %v1490
        %1500 = vmatmul.bf16.gmra.mxu0 %v1487
        %v1501 = vpop.f32.mrf.mxu0
        %v1502 = vadd.f32 0.0, %v1501
        %v1503 = vpop.f32.mrf.mxu0
        %1504 = vdwg.mxu0
        %v1505 = vsel %vm546, %v1445, -inf
        %1506 = vmax.xlane.f32.xlu0 %v1505
        %v1507 = vpop.xlane.xlu0 %1506
        %v1508 = vsel %vm546, %v1464, -inf
        %1509 = vmax.xlane.f32.xlu0 %v1508
        %v1510 = vpop.xlane.xlu0 %1509
        %v1511 = vsel %vm546, %v1483, -inf
        %1512 = vmax.xlane.f32.xlu0 %v1511
        %v1513 = vpop.xlane.xlu0 %1512
        %v1514 = vsel %vm546, %v1502, -inf
        %1515 = vmax.xlane.f32.xlu0 %v1514
        %v1516 = vpop.xlane.xlu0 %1515
        %v1517 = vsub.f32 %v1445, %v1507
        %v1518 = vsub.f32 %v1464, %v1510
        %v1519 = vsub.f32 %v1483, %v1513
        %v1520 = vsub.f32 %v1502, %v1516
        %v1521 = vmul.f32 %v1517, 1.442695
        %v1522 = vpow.pop %v1521
        %v1523 = vmul.f32 %v1518, 1.442695
        %v1524 = vpow.pop %v1523
        %v1525 = vmul.f32 %v1519, 1.442695
        %v1526 = vpow.pop %v1525
        %v1527 = vmul.f32 %v1520, 1.442695
        %v1528 = vpow.pop %v1527
        %v1529 = vsel %vm546, %v1522, 0.0
        %1530 = vadd.xlane.f32.xlu0 %v1529
        %v1531 = vpop.xlane.xlu0 %1530
        %v1532 = vsel %vm546, %v1524, 0.0
        %1533 = vadd.xlane.f32.xlu0 %v1532
        %v1534 = vpop.xlane.xlu0 %1533
        %v1535 = vsel %vm546, %v1526, 0.0
        %1536 = vadd.xlane.f32.xlu0 %v1535
        %v1537 = vpop.xlane.xlu0 %1536
        %v1538 = vsel %vm546, %v1528, 0.0
        %1539 = vadd.xlane.f32.xlu0 %v1538
        %v1540 = vpop.xlane.xlu0 %1539
        %v1541 = vrcp.pop %v1531
        %v1542 = vrcp.pop %v1534
        %v1543 = vrcp.pop %v1537
        %v1544 = vrcp.pop %v1540
        %v1545 = vmul.f32 %v1522, %v1541
        %v1546 = vmul.f32 %v1524, %v1542
        %v1547 = vmul.f32 %v1526, %v1543
        %v1548 = vmul.f32 %v1528, %v1544
        %v1549 = vpack.c.bf16 %v1545, %v1545
        %v1550 = vpack.c.bf16 %v1546, %v1546
        %v1551 = vpack.c.bf16 %v1547, %v1547
        %v1552 = vpack.c.bf16 %v1548, %v1548
        %1553 = vxpose.xlu0.c.b16.start [1/8] %v1334, 128
        %1554 = vxpose.xlu0.c.b16.cont [2/8] 0, 128
        %1555 = vxpose.xlu0.c.b16.cont [3/8] 0, 128
        %1556 = vxpose.xlu0.c.b16.cont [4/8] 0, 128
        %1557 = vxpose.xlu0.c.b16.cont [5/8] 0, 128
        %1558 = vxpose.xlu0.c.b16.cont [6/8] 0, 128
        %1559 = vxpose.xlu0.c.b16.cont [7/8] 0, 128
        %1560 = vxpose.xlu0.c.b16.end [8/8] 0, 128
        %v1561 = vpop.trf.xlu0
        %v1562 = vpop.trf.xlu0
        %v1563 = vpop.trf.xlu0
        %v1564 = vpop.trf.xlu0
        %v1565 = vpop.trf.xlu0
        %v1566 = vpop.trf.xlu0
        %v1567 = vpop.trf.xlu0
        %v1568 = vpop.trf.xlu0
        %1569 = vxpose.xlu0.c.b16.start [1/8] %v1337, 128
        %1570 = vxpose.xlu0.c.b16.cont [2/8] 0, 128
        %1571 = vxpose.xlu0.c.b16.cont [3/8] 0, 128
        %1572 = vxpose.xlu0.c.b16.cont [4/8] 0, 128
        %1573 = vxpose.xlu0.c.b16.cont [5/8] 0, 128
        %1574 = vxpose.xlu0.c.b16.cont [6/8] 0, 128
        %1575 = vxpose.xlu0.c.b16.cont [7/8] 0, 128
        %1576 = vxpose.xlu0.c.b16.end [8/8] 0, 128
        %v1577 = vpop.trf.xlu0
        %v1578 = vpop.trf.xlu0
        %v1579 = vpop.trf.xlu0
        %v1580 = vpop.trf.xlu0
        %v1581 = vpop.trf.xlu0
        %v1582 = vpop.trf.xlu0
        %v1583 = vpop.trf.xlu0
        %v1584 = vpop.trf.xlu0
        %1585 = vxpose.xlu0.c.b16.start [1/8] %v1340, 128
        %1586 = vxpose.xlu0.c.b16.cont [2/8] 0, 128
        %1587 = vxpose.xlu0.c.b16.cont [3/8] 0, 128
        %1588 = vxpose.xlu0.c.b16.cont [4/8] 0, 128
        %1589 = vxpose.xlu0.c.b16.cont [5/8] 0, 128
        %1590 = vxpose.xlu0.c.b16.cont [6/8] 0, 128
        %1591 = vxpose.xlu0.c.b16.cont [7/8] 0, 128
        %1592 = vxpose.xlu0.c.b16.end [8/8] 0, 128
        %v1593 = vpop.trf.xlu0
        %v1594 = vpop.trf.xlu0
        %v1595 = vpop.trf.xlu0
        %v1596 = vpop.trf.xlu0
        %v1597 = vpop.trf.xlu0
        %v1598 = vpop.trf.xlu0
        %v1599 = vpop.trf.xlu0
        %v1600 = vpop.trf.xlu0
        %1601 = vxpose.xlu0.c.b16.start [1/8] %v1343, 128
        %1602 = vxpose.xlu0.c.b16.cont [2/8] 0, 128
        %1603 = vxpose.xlu0.c.b16.cont [3/8] 0, 128
        %1604 = vxpose.xlu0.c.b16.cont [4/8] 0, 128
        %1605 = vxpose.xlu0.c.b16.cont [5/8] 0, 128
        %1606 = vxpose.xlu0.c.b16.cont [6/8] 0, 128
        %1607 = vxpose.xlu0.c.b16.cont [7/8] 0, 128
        %1608 = vxpose.xlu0.c.b16.end [8/8] 0, 128
        %v1609 = vpop.trf.xlu0
        %v1610 = vpop.trf.xlu0
        %v1611 = vpop.trf.xlu0
        %v1612 = vpop.trf.xlu0
        %v1613 = vpop.trf.xlu0
        %v1614 = vpop.trf.xlu0
        %v1615 = vpop.trf.xlu0
        %v1616 = vpop.trf.xlu0
        %v1618 = vsel %vm546, %v1561, 0
        %v1621 = vsel %vm546, %v1549, 0
        %1623 = vmatpush.bf16.xpose.msra.mxu0 0
        %1624 = vmatpush.bf16.xpose.msra.mxu0 0
        %1625 = vmatpush.bf16.xpose.msra.mxu0 0
        %1626 = vmatpush.bf16.xpose.msra.mxu0 0
        %1627 = vmatpush.bf16.xpose.msra.mxu0 0
        %1628 = vmatpush.bf16.xpose.msra.mxu0 0
        %1629 = vmatpush.bf16.xpose.msra.mxu0 0
        %1630 = vmatpush.bf16.xpose.msra.mxu0 %v1621
        %1631 = vmatmul.bf16.gmra.mxu0 %v1618
        %v1632 = vpop.f32.mrf.mxu0
        %v1633 = vadd.f32 0.0, %v1632
        %v1634 = vpop.f32.mrf.mxu0
        %1635 = vdwg.mxu0
        %v1637 = vsel %vm546, %v1577, 0
        %v1640 = vsel %vm546, %v1550, 0
        %1642 = vmatpush.bf16.xpose.msra.mxu0 0
        %1643 = vmatpush.bf16.xpose.msra.mxu0 0
        %1644 = vmatpush.bf16.xpose.msra.mxu0 0
        %1645 = vmatpush.bf16.xpose.msra.mxu0 0
        %1646 = vmatpush.bf16.xpose.msra.mxu0 0
        %1647 = vmatpush.bf16.xpose.msra.mxu0 0
        %1648 = vmatpush.bf16.xpose.msra.mxu0 0
        %1649 = vmatpush.bf16.xpose.msra.mxu0 %v1640
        %1650 = vmatmul.bf16.gmra.mxu0 %v1637
        %v1651 = vpop.f32.mrf.mxu0
        %v1652 = vadd.f32 0.0, %v1651
        %v1653 = vpop.f32.mrf.mxu0
        %1654 = vdwg.mxu0
        %v1656 = vsel %vm546, %v1593, 0
        %v1659 = vsel %vm546, %v1551, 0
        %1661 = vmatpush.bf16.xpose.msra.mxu0 0
        %1662 = vmatpush.bf16.xpose.msra.mxu0 0
        %1663 = vmatpush.bf16.xpose.msra.mxu0 0
        %1664 = vmatpush.bf16.xpose.msra.mxu0 0
        %1665 = vmatpush.bf16.xpose.msra.mxu0 0
        %1666 = vmatpush.bf16.xpose.msra.mxu0 0
        %1667 = vmatpush.bf16.xpose.msra.mxu0 0
        %1668 = vmatpush.bf16.xpose.msra.mxu0 %v1659
        %1669 = vmatmul.bf16.gmra.mxu0 %v1656
        %v1670 = vpop.f32.mrf.mxu0
        %v1671 = vadd.f32 0.0, %v1670
        %v1672 = vpop.f32.mrf.mxu0
        %1673 = vdwg.mxu0
        %v1675 = vsel %vm546, %v1609, 0
        %v1678 = vsel %vm546, %v1552, 0
        %1680 = vmatpush.bf16.xpose.msra.mxu0 0
        %1681 = vmatpush.bf16.xpose.msra.mxu0 0
        %1682 = vmatpush.bf16.xpose.msra.mxu0 0
        %1683 = vmatpush.bf16.xpose.msra.mxu0 0
        %1684 = vmatpush.bf16.xpose.msra.mxu0 0
        %1685 = vmatpush.bf16.xpose.msra.mxu0 0
        %1686 = vmatpush.bf16.xpose.msra.mxu0 0
        %1687 = vmatpush.bf16.xpose.msra.mxu0 %v1678
        %1688 = vmatmul.bf16.gmra.mxu0 %v1675
        %v1689 = vpop.f32.mrf.mxu0
        %v1690 = vadd.f32 0.0, %v1689
        %v1691 = vpop.f32.mrf.mxu0
        %1692 = vdwg.mxu0
        %1693 = vxpose.xlu0.b32.start [1/16] %v1633, 128
        %1694 = vxpose.xlu0.b32.cont [2/16] 0.0, 128
        %1695 = vxpose.xlu0.b32.cont [3/16] 0.0, 128
        %1696 = vxpose.xlu0.b32.cont [4/16] 0.0, 128
        %1697 = vxpose.xlu0.b32.cont [5/16] 0.0, 128
        %1698 = vxpose.xlu0.b32.cont [6/16] 0.0, 128
        %1699 = vxpose.xlu0.b32.cont [7/16] 0.0, 128
        %1700 = vxpose.xlu0.b32.cont [8/16] 0.0, 128
        %1701 = vxpose.xlu0.b32.cont [9/16] 0.0, 128
        %1702 = vxpose.xlu0.b32.cont [10/16] 0.0, 128
        %1703 = vxpose.xlu0.b32.cont [11/16] 0.0, 128
        %1704 = vxpose.xlu0.b32.cont [12/16] 0.0, 128
        %1705 = vxpose.xlu0.b32.cont [13/16] 0.0, 128
        %1706 = vxpose.xlu0.b32.cont [14/16] 0.0, 128
        %1707 = vxpose.xlu0.b32.cont [15/16] 0.0, 128
        %1708 = vxpose.xlu0.b32.end [16/16] 0.0, 128
        %v1709 = vpop.trf.xlu0
        %v1710 = vpop.trf.xlu0
        %v1711 = vpop.trf.xlu0
        %v1712 = vpop.trf.xlu0
        %v1713 = vpop.trf.xlu0
        %v1714 = vpop.trf.xlu0
        %v1715 = vpop.trf.xlu0
        %v1716 = vpop.trf.xlu0
        %v1717 = vpop.trf.xlu0
        %v1718 = vpop.trf.xlu0
        %v1719 = vpop.trf.xlu0
        %v1720 = vpop.trf.xlu0
        %v1721 = vpop.trf.xlu0
        %v1722 = vpop.trf.xlu0
        %v1723 = vpop.trf.xlu0
        %v1724 = vpop.trf.xlu0
        %1725 = vxpose.xlu0.b32.start [1/16] %v1652, 128
        %1726 = vxpose.xlu0.b32.cont [2/16] 0.0, 128
        %1727 = vxpose.xlu0.b32.cont [3/16] 0.0, 128
        %1728 = vxpose.xlu0.b32.cont [4/16] 0.0, 128
        %1729 = vxpose.xlu0.b32.cont [5/16] 0.0, 128
        %1730 = vxpose.xlu0.b32.cont [6/16] 0.0, 128
        %1731 = vxpose.xlu0.b32.cont [7/16] 0.0, 128
        %1732 = vxpose.xlu0.b32.cont [8/16] 0.0, 128
        %1733 = vxpose.xlu0.b32.cont [9/16] 0.0, 128
        %1734 = vxpose.xlu0.b32.cont [10/16] 0.0, 128
        %1735 = vxpose.xlu0.b32.cont [11/16] 0.0, 128
        %1736 = vxpose.xlu0.b32.cont [12/16] 0.0, 128
        %1737 = vxpose.xlu0.b32.cont [13/16] 0.0, 128
        %1738 = vxpose.xlu0.b32.cont [14/16] 0.0, 128
        %1739 = vxpose.xlu0.b32.cont [15/16] 0.0, 128
        %1740 = vxpose.xlu0.b32.end [16/16] 0.0, 128
        %v1741 = vpop.trf.xlu0
        %v1742 = vpop.trf.xlu0
        %v1743 = vpop.trf.xlu0
        %v1744 = vpop.trf.xlu0
        %v1745 = vpop.trf.xlu0
        %v1746 = vpop.trf.xlu0
        %v1747 = vpop.trf.xlu0
        %v1748 = vpop.trf.xlu0
        %v1749 = vpop.trf.xlu0
        %v1750 = vpop.trf.xlu0
        %v1751 = vpop.trf.xlu0
        %v1752 = vpop.trf.xlu0
        %v1753 = vpop.trf.xlu0
        %v1754 = vpop.trf.xlu0
        %v1755 = vpop.trf.xlu0
        %v1756 = vpop.trf.xlu0
        %1757 = vxpose.xlu0.b32.start [1/16] %v1671, 128
        %1758 = vxpose.xlu0.b32.cont [2/16] 0.0, 128
        %1759 = vxpose.xlu0.b32.cont [3/16] 0.0, 128
        %1760 = vxpose.xlu0.b32.cont [4/16] 0.0, 128
        %1761 = vxpose.xlu0.b32.cont [5/16] 0.0, 128
        %1762 = vxpose.xlu0.b32.cont [6/16] 0.0, 128
        %1763 = vxpose.xlu0.b32.cont [7/16] 0.0, 128
        %1764 = vxpose.xlu0.b32.cont [8/16] 0.0, 128
        %1765 = vxpose.xlu0.b32.cont [9/16] 0.0, 128
        %1766 = vxpose.xlu0.b32.cont [10/16] 0.0, 128
        %1767 = vxpose.xlu0.b32.cont [11/16] 0.0, 128
        %1768 = vxpose.xlu0.b32.cont [12/16] 0.0, 128
        %1769 = vxpose.xlu0.b32.cont [13/16] 0.0, 128
        %1770 = vxpose.xlu0.b32.cont [14/16] 0.0, 128
        %1771 = vxpose.xlu0.b32.cont [15/16] 0.0, 128
        %1772 = vxpose.xlu0.b32.end [16/16] 0.0, 128
        %v1773 = vpop.trf.xlu0
        %v1774 = vpop.trf.xlu0
        %v1775 = vpop.trf.xlu0
        %v1776 = vpop.trf.xlu0
        %v1777 = vpop.trf.xlu0
        %v1778 = vpop.trf.xlu0
        %v1779 = vpop.trf.xlu0
        %v1780 = vpop.trf.xlu0
        %v1781 = vpop.trf.xlu0
        %v1782 = vpop.trf.xlu0
        %v1783 = vpop.trf.xlu0
        %v1784 = vpop.trf.xlu0
        %v1785 = vpop.trf.xlu0
        %v1786 = vpop.trf.xlu0
        %v1787 = vpop.trf.xlu0
        %v1788 = vpop.trf.xlu0
        %1789 = vxpose.xlu0.b32.start [1/16] %v1690, 128
        %1790 = vxpose.xlu0.b32.cont [2/16] 0.0, 128
        %1791 = vxpose.xlu0.b32.cont [3/16] 0.0, 128
        %1792 = vxpose.xlu0.b32.cont [4/16] 0.0, 128
        %1793 = vxpose.xlu0.b32.cont [5/16] 0.0, 128
        %1794 = vxpose.xlu0.b32.cont [6/16] 0.0, 128
        %1795 = vxpose.xlu0.b32.cont [7/16] 0.0, 128
        %1796 = vxpose.xlu0.b32.cont [8/16] 0.0, 128
        %1797 = vxpose.xlu0.b32.cont [9/16] 0.0, 128
        %1798 = vxpose.xlu0.b32.cont [10/16] 0.0, 128
        %1799 = vxpose.xlu0.b32.cont [11/16] 0.0, 128
        %1800 = vxpose.xlu0.b32.cont [12/16] 0.0, 128
        %1801 = vxpose.xlu0.b32.cont [13/16] 0.0, 128
        %1802 = vxpose.xlu0.b32.cont [14/16] 0.0, 128
        %1803 = vxpose.xlu0.b32.cont [15/16] 0.0, 128
        %1804 = vxpose.xlu0.b32.end [16/16] 0.0, 128
        %v1805 = vpop.trf.xlu0
        %v1806 = vpop.trf.xlu0
        %v1807 = vpop.trf.xlu0
        %v1808 = vpop.trf.xlu0
        %v1809 = vpop.trf.xlu0
        %v1810 = vpop.trf.xlu0
        %v1811 = vpop.trf.xlu0
        %v1812 = vpop.trf.xlu0
        %v1813 = vpop.trf.xlu0
        %v1814 = vpop.trf.xlu0
        %v1815 = vpop.trf.xlu0
        %v1816 = vpop.trf.xlu0
        %v1817 = vpop.trf.xlu0
        %v1818 = vpop.trf.xlu0
        %v1819 = vpop.trf.xlu0
        %v1820 = vpop.trf.xlu0
        %v1821 = vrot.slane %v1773, 4
        %v1822 = vsel %vm941, %v1821, %v1709
        %v1823 = vrot.slane %v1709, 4
        %v1824 = vsel %vm941, %v1773, %v1823
        %v1826 = vunpack.c.l.s4 1983009808
        %v1827 = vunpack.c.0.s8 %v1826
        %v1828 = vperm.slane %v1822, %v1827
        %v1830 = vunpack.c.l.s4 1983009808
        %v1831 = vunpack.c.0.s8 %v1830
        %v1832 = vperm.slane %v1824, %v1831
        %v1833 = vrot.slane %v1805, 4
        %v1834 = vsel %vm941, %v1833, %v1741
        %v1835 = vrot.slane %v1741, 4
        %v1836 = vsel %vm941, %v1805, %v1835
        %v1838 = vunpack.c.l.s4 1983009808
        %v1839 = vunpack.c.0.s8 %v1838
        %v1840 = vperm.slane %v1834, %v1839
        %v1842 = vunpack.c.l.s4 1983009808
        %v1843 = vunpack.c.0.s8 %v1842
        %v1844 = vperm.slane %v1836, %v1843
        %v1845 = vrot.slane %v1840, 4
        %v1846 = vsel %vm941, %v1845, %v1828
        %v1847 = vrot.slane %v1828, 4
        %v1848 = vsel %vm941, %v1840, %v1847
        %v1850 = vunpack.c.l.s4 1934713408
        %v1851 = vunpack.c.0.s8 %v1850
        %v1852 = vperm.slane %v1846, %v1851
        %v1854 = vunpack.c.l.s4 1934713408
        %v1855 = vunpack.c.0.s8 %v1854
        %v1856 = vperm.slane %v1848, %v1855
        %v1857 = vrot.slane %v1844, 4
        %v1858 = vsel %vm941, %v1857, %v1832
        %v1859 = vrot.slane %v1832, 4
        %v1860 = vsel %vm941, %v1844, %v1859
        %v1862 = vunpack.c.l.s4 1934713408
        %v1863 = vunpack.c.0.s8 %v1862
        %v1864 = vperm.slane %v1858, %v1863
        %v1866 = vunpack.c.l.s4 1934713408
        %v1867 = vunpack.c.0.s8 %v1866
        %v1868 = vperm.slane %v1860, %v1867
        %v1869 = vrot.slane %v1852, 4
        %v1870 = vsel %vm941, 0.0, %v1869
        %v1871 = vrot.slane %v1856, 4
        %v1872 = vsel %vm941, 0.0, %v1871
        %v1873 = vrot.slane %v1864, 4
        %v1874 = vsel %vm941, 0.0, %v1873
        %v1875 = vrot.slane %v1868, 4
        %v1876 = vsel %vm941, 0.0, %v1875
        %v1877 = vsel %vm941, %v1871, %v1852
        %v1879 = vunpack.c.l.s4 1983009808
        %v1880 = vunpack.c.0.s8 %v1879
        %v1881 = vperm.slane %v1877, %v1880
        %v1882 = vrot.slane %v1872, 4
        %v1883 = vsel %vm941, %v1882, %v1870
        %v1885 = vunpack.c.l.s4 1983009808
        %v1886 = vunpack.c.0.s8 %v1885
        %v1887 = vperm.slane %v1883, %v1886
        %v1888 = vsel %vm941, %v1875, %v1864
        %v1890 = vunpack.c.l.s4 1983009808
        %v1891 = vunpack.c.0.s8 %v1890
        %v1892 = vperm.slane %v1888, %v1891
        %v1893 = vrot.slane %v1876, 4
        %v1894 = vsel %vm941, %v1893, %v1874
        %v1896 = vunpack.c.l.s4 1983009808
        %v1897 = vunpack.c.0.s8 %v1896
        %v1898 = vperm.slane %v1894, %v1897
        %v1899 = vrot.slane %v1887, 4
        %v1900 = vsel %vm941, %v1899, %v1881
        %v1901 = vrot.slane %v1881, 4
        %v1902 = vsel %vm941, %v1887, %v1901
        %v1904 = vunpack.c.l.s4 1934713408
        %v1905 = vunpack.c.0.s8 %v1904
        %v1906 = vperm.slane %v1900, %v1905
        %v1908 = vunpack.c.l.s4 1934713408
        %v1909 = vunpack.c.0.s8 %v1908
        %v1910 = vperm.slane %v1902, %v1909
        %v1911 = vrot.slane %v1898, 4
        %v1912 = vsel %vm941, %v1911, %v1892
        %v1913 = vrot.slane %v1892, 4
        %v1914 = vsel %vm941, %v1898, %v1913
        %v1916 = vunpack.c.l.s4 1934713408
        %v1917 = vunpack.c.0.s8 %v1916
        %v1918 = vperm.slane %v1912, %v1917
        %v1920 = vunpack.c.l.s4 1934713408
        %v1921 = vunpack.c.0.s8 %v1920
        %v1922 = vperm.slane %v1914, %v1921
        %v1923 = vrot.slane %v1918, 4
        %v1924 = vsel %vm941, %v1923, %v1906
        %v1925 = vrot.slane %v1906, 4
        %v1926 = vsel %vm941, %v1918, %v1925
        %v1927 = vrot.slane %v1922, 4
        %v1928 = vsel %vm941, %v1927, %v1910
        %v1929 = vrot.slane %v1910, 4
        %v1930 = vsel %vm941, %v1922, %v1929
        %1932 = vrot.lane.b32.xlu0 %v1926, 8
        %v1933 = vpop.permute.xlu0 %1932
        %1936 = vrot.lane.b32.xlu0 %v1928, 16
        %v1937 = vpop.permute.xlu0 %1936
        %1940 = vrot.lane.b32.xlu0 %v1930, 24
        %v1941 = vpop.permute.xlu0 %1940
        %v1943 = vsel %vm546, %v1924, %v1933
        %v1944 = vsel %vm1064, %v1943, %v1937
        %v1945 = vsel %vm1066, %v1944, %v1941
        %v1946 = vpack.c.bf16 %v1945, %v1945
        %v1947 = vperm.slane %v1258, 1
        %v1952 = vunpack.c.l.b16 %v1239
        %v1953 = vunpack.c.l.b16 %v1240
        %v1954 = vunpack.c.l.b16 %v1241
        %v1955 = vunpack.c.l.b16 %v1242
        %v1956 = vpack.c.b16 %v1953, %v1952
        %v1957 = vpack.c.b16 %v1955, %v1954
        %v1961 = vsel %vm390, %v1946, 0
        %1963 = vmatpush.bf16.msra.mxu0 0
        %1964 = vmatpush.bf16.msra.mxu0 0
        %1965 = vmatpush.bf16.msra.mxu0 0
        %1966 = vmatpush.bf16.msra.mxu0 0
        %1967 = vmatpush.bf16.msra.mxu0 0
        %1968 = vmatpush.bf16.msra.mxu0 0
        %1969 = vmatpush.bf16.msra.mxu0 %v1957
        %1970 = vmatpush.bf16.msra.mxu0 %v1956
        %1971 = vmatmul.bf16.gmra.mxu0 %v1961
        %v1972 = vpop.f32.mrf.mxu0
        %v1973 = vadd.f32 %v1947, %v1972
        %v1974 = vpop.f32.mrf.mxu0
        %1975 = vdwg.mxu0
        %v1976 = vadd.f32 %v1232, %v1973
        %v1977 = vsel %vm390, %v1976, 0.0
        %1978 = vadd.xlane.f32.xlu0 %v1977
        %v1979 = vpop.xlane.xlu0 %1978
        %v1980 = vmul.f32 %v1979, %v1108
        %v1981 = vsub.f32 %v1976, %v1980
        %v1982 = vmul.f32 %v1981, %v1981
        %v1983 = vsel %vm390, %v1982, 0.0
        %1984 = vadd.xlane.f32.xlu0 %v1983
        %v1985 = vpop.xlane.xlu0 %1984
        %v1986 = vmul.f32 %v1985, %v1108
        %v1987 = vadd.f32 %v1986, 1e-05
        %v1988 = vrsqrt.pop %v1987
        %v1989 = vmul.f32 %v1988, %v1987
        %v1990 = vmul.f32 %v1989, %v1988
        %v1991 = vmul.f32 0.5, %v1990
        %v1992 = vsub.f32 1.5, %v1991
        %v1993 = vmul.f32 %v1988, %v1992
        %vm1994 = vweird.f32 %v1987
        %vm1995 = vweird.f32 %v1988
        %vm1996 = vmor %vm1994, %vm1995
        %v1997 = vsel %vm1996, %v1988, %v1993
        %v1998 = vmul.f32 %v1981, %v1997
        %v1999 = vperm.slane %v1258, 4
        %v2000 = vmul.f32 %v1998, %v1999
        %v2001 = vperm.slane %v1258, 5
        %v2002 = vadd.f32 %v2000, %v2001
        %v2003 = vpack.c.bf16 %v2002, %v2002
        %v2004 = vperm.slane %v1258, 2
        %v2009 = vunpack.c.l.b16 %v1244
        %v2010 = vunpack.c.l.b16 %v1245
        %v2011 = vunpack.c.l.b16 %v1246
        %v2012 = vunpack.c.l.b16 %v1247
        %v2013 = vpack.c.b16 %v2010, %v2009
        %v2014 = vpack.c.b16 %v2012, %v2011
        %v2018 = vsel %vm390, %v2003, 0
        %2020 = vmatpush.bf16.msra.mxu0 0
        %2021 = vmatpush.bf16.msra.mxu0 0
        %2022 = vmatpush.bf16.msra.mxu0 0
        %2023 = vmatpush.bf16.msra.mxu0 0
        %2024 = vmatpush.bf16.msra.mxu0 0
        %2025 = vmatpush.bf16.msra.mxu0 0
        %2026 = vmatpush.bf16.msra.mxu0 %v2014
        %2027 = vmatpush.bf16.msra.mxu0 %v2013
        %2028 = vmatmul.bf16.gmra.mxu0 %v2018
        %v2029 = vpop.f32.mrf.mxu0
        %v2030 = vadd.f32 %v2004, %v2029
        %v2031 = vpop.f32.mrf.mxu0
        %2032 = vdwg.mxu0
        %v2033 = vmax.f32 %v2030, 0.0
        %v2034 = vpack.c.bf16 %v2033, %v2033
        %v2035 = vperm.slane %v1258, 3
        %v2044 = vunpack.c.l.b16 %v1249
        %v2045 = vunpack.c.l.b16 %v1250
        %v2046 = vunpack.c.l.b16 %v1251
        %v2047 = vunpack.c.l.b16 %v1252
        %v2048 = vunpack.c.l.b16 %v1253
        %v2049 = vunpack.c.l.b16 %v1254
        %v2050 = vunpack.c.l.b16 %v1255
        %v2051 = vunpack.c.l.b16 %v1256
        %v2052 = vpack.c.b16 %v2045, %v2044
        %v2053 = vpack.c.b16 %v2047, %v2046
        %v2054 = vpack.c.b16 %v2049, %v2048
        %v2055 = vpack.c.b16 %v2051, %v2050
        %v2061 = vsel %vm1189, %v2034, 0
        %2063 = vmatpush.bf16.msra.mxu0 0
        %2064 = vmatpush.bf16.msra.mxu0 0
        %2065 = vmatpush.bf16.msra.mxu0 0
        %2066 = vmatpush.bf16.msra.mxu0 0
        %2067 = vmatpush.bf16.msra.mxu0 %v2055
        %2068 = vmatpush.bf16.msra.mxu0 %v2054
        %2069 = vmatpush.bf16.msra.mxu0 %v2053
        %2070 = vmatpush.bf16.msra.mxu0 %v2052
        %2071 = vmatmul.bf16.gmra.mxu0 %v2061
        %v2072 = vpop.f32.mrf.mxu0
        %v2073 = vadd.f32 %v2035, %v2072
        %v2074 = vpop.f32.mrf.mxu0
        %2075 = vdwg.mxu0
        %v2076 = vadd.f32 %v2002, %v2073
        %v2077 = vsel %vm390, %v2076, 0.0
        %2078 = vadd.xlane.f32.xlu0 %v2077
        %v2079 = vpop.xlane.xlu0 %2078
        %v2080 = vmul.f32 %v2079, %v1108
        %v2081 = vsub.f32 %v2076, %v2080
        %v2082 = vmul.f32 %v2081, %v2081
        %v2083 = vsel %vm390, %v2082, 0.0
        %2084 = vadd.xlane.f32.xlu0 %v2083
        %v2085 = vpop.xlane.xlu0 %2084
        %v2086 = vmul.f32 %v2085, %v1108
        %v2087 = vadd.f32 %v2086, 1e-05
        %v2088 = vrsqrt.pop %v2087
        %v2089 = vmul.f32 %v2088, %v2087
        %v2090 = vmul.f32 %v2089, %v2088
        %v2091 = vmul.f32 0.5, %v2090
        %v2092 = vsub.f32 1.5, %v2091
        %v2093 = vmul.f32 %v2088, %v2092
        %vm2094 = vweird.f32 %v2087
        %vm2095 = vweird.f32 %v2088
        %vm2096 = vmor %vm2094, %vm2095
        %v2097 = vsel %vm2096, %v2088, %v2093
        %v2098 = vmul.f32 %v2081, %v2097
        %v2099 = vperm.slane %v1258, 6
        %v2100 = vmul.f32 %v2098, %v2099
        %v2101 = vperm.slane %v1258, 7
        %v2102 = vadd.f32 %v2100, %v2101
        %2103 = vst.msk [vmem:[%s350] sm:$0xff] %vm390, %v2102
        %s2104 = sand.u32 %s192, 1
        %s2105 = scalar_lea.sflag [#allocation4], %s2104
        %s2106 = sand.u32 %s192, 1
        %s2107 = smul.addr %s2106, 8
        %s2108 = scalar_lea.vmem [#allocation8], %s2107
        // Predicated region
        $region61: #{tpu_custom_call.1} parent=47 // pred_check
          %p2109 = pneg %p202
        $region62: #{tpu_custom_call.1} parent=47 // pred_check_branch
          %2111 = sbr.rel (%p2109) target = $region64
        $region63: #{tpu_custom_call.1} parent=47 // pred_region
          %2113 = vsyncadd %s2105, 0
          %s2114 = smul.addr %s27, 8
          %s2115 = scalar_lea.hbm %s7, %s2114
          %s2117 = sshll.u32 %s2108, 4
          %s2118 = int_to_ptr.vmem [resolvable:$true] %s2117
          %s2119 = sshll.u32 %s2115, 4
          %s2120 = int_to_ptr.hbm [resolvable:$true] %s2119
          %2122 = dma.vmem_to_hbm [thread:$0]  %s2118, 128, %s2120, %s2105
        $region64: #{tpu_custom_call.1} parent=47 // pred_fallthru
          _
      $region48: #{tpu_custom_call.1} parent=5 // pred_fallthru
        _
      %p2123 = scmp.le.s32.totalorder 2, %s22
      // Predicated region
      $region65: #{tpu_custom_call.1} parent=5 // pred_check
        %p2124 = pneg %p2123
      $region66: #{tpu_custom_call.1} parent=5 // pred_check_branch
        %2126 = sbr.rel (%p2124) target = $region68
      $region67: #{tpu_custom_call.1} parent=5 // pred_region
        %s2127 = ssub.s32 %s22, 2
        // Predicated region
        $region69: #{tpu_custom_call.1} parent=67 // pred_check
          %p2128 = pneg %p208
        $region70: #{tpu_custom_call.1} parent=67 // pred_check_branch
          %2130 = sbr.rel (%p2128) target = $region72
        $region71: #{tpu_custom_call.1} parent=67 // pred_region
          %s2131 = sand.u32 %s193, 1
          %s2132 = scalar_lea.sflag [#allocation4], %s2131
          %s2133 = sand.u32 %s193, 1
          %s2134 = smul.addr %s2133, 8
          %s2135 = scalar_lea.vmem [#allocation8], %s2134
          %2137 = dma.done %s2132, 128
        $region72: #{tpu_custom_call.1} parent=67 // pred_fallthru
          _
      $region68: #{tpu_custom_call.1} parent=5 // pred_fallthru
        _
    $region6: #{tpu_custom_call.1} parent=1 // loop_footer
      %s26 = sadd.s32 1, %s22
    $region7: #{tpu_custom_call.1} parent=1 // loop_footer_branch
      %21 = sbr.rel target = $region3
    $region8: #{tpu_custom_call.1} parent=1 // loop_exit
      _
    %2138 = vsyncpa [#allocation3], 1
    %s2139 = scalar_lea.sflag [#allocation3], 1
    %2140 = vsyncpa %s2139, 1
    %2141 = vsyncpa [#allocation6], 1
    %s2142 = scalar_lea.sflag [#allocation6], 1
    %2143 = vsyncpa %s2142, 1
    %2144 = vsyncpa [#allocation4], 1
    %s2145 = scalar_lea.sflag [#allocation4], 1
    %2146 = vsyncpa %s2145, 1

</llo_original>
